<compile_context>
chip_gen: v7x
topology: tpu7x:2x2x1
jax: 0.10.0
libtpu: 0.0.40
codegen_flags: <defaults>
</compile_context>

<pallas_src>
import functools

import numpy as np
import jax
import jax.numpy as jnp
from jax.experimental import pallas as pl
from jax.experimental.pallas import tpu as pltpu

_SQRT_2_OVER_PI = 0.7978845608028654
_INV_SQRT2 = 0.7071067811865476


def _gelu_tanh(x):
    # tanh-approx GELU; tanh goes to the EUP. f32 math (safe on v5e's VPU).
    return 0.5 * x * (1.0 + jnp.tanh(_SQRT_2_OVER_PI * (x + 0.044715 * x * x * x)))


# ------------------------------ Pallas kernel --------------------------------

def dc_kernel(frames_ref, wemb_ref, bemb_ref, wstk_ref, bstk_ref,
              whead_ref, bhead_ref, o_ref, acc_ref, *, num_layers, M, D, T):
    """Embedding + num_layers GC layers + fused head on one (C, tn) time tile.

    Residual-stream channels are in (d m) order: c = d*M + m.
    Matmul inputs are bf16 (native MXU); accumulation / GELU / residual are f32.
    """
    j = pl.program_id(1)

    @pl.when(j == 0)
    def _init():
        acc_ref[...] = jnp.zeros_like(acc_ref)

    # --- embedding: block-diagonal 1x1 conv over pre-extracted frames ---
    f = frames_ref[0]                                            # (M*P, tn) bf16
    x = jnp.dot(wemb_ref[...], f, preferred_element_type=jnp.float32)
    x = x + bemb_ref[...]                                        # (C, tn) f32

    # --- GC layers (folded: 3 matmuls + 2 GELUs + residual each) ---
    for l in range(num_layers):
        z = _gelu_tanh(
            jnp.dot(wstk_ref[3 * l + 0], x.astype(jnp.bfloat16),
                    preferred_element_type=jnp.float32) + bstk_ref[3 * l + 0])
        z = _gelu_tanh(
            jnp.dot(wstk_ref[3 * l + 1], z.astype(jnp.bfloat16),
                    preferred_element_type=jnp.float32) + bstk_ref[3 * l + 1])
        x = (jnp.dot(wstk_ref[3 * l + 2], z.astype(jnp.bfloat16),
                     preferred_element_type=jnp.float32)
             + bstk_ref[3 * l + 2] + x)                          # residual

    # --- fused head: this tile's partial contribution to pred (M, T) ---
    # whead block is (tn, D*T) with whead[nn, d*T + t] = W_head[t, d*N + n0 + nn].
    zh = jnp.dot(x.astype(jnp.bfloat16), whead_ref[...],
                 preferred_element_type=jnp.float32)             # (C, D*T)
    acc = acc_ref[...]
    for d in range(D):
        # channel block d*M..d*M+M all share d -> block-diagonal extraction.
        acc = acc + zh[d * M:(d + 1) * M, d * T:(d + 1) * T]
    acc_ref[...] = acc

    @pl.when(j == pl.num_programs(1) - 1)
    def _finalize():
        o_ref[0] = (acc_ref[...] + bhead_ref[...]).astype(o_ref.dtype)


# --------------------------------- wrapper ------------------------------------

def _pick_tn(N):
    # 512 max: keeps the f32 residual/intermediate live ranges small (v5e has
    # a single vector-store slot; larger tiles start spilling).
    for t in (512, 256, 128):
        if N % t == 0:
            return t
    return N  # fallback: full-length tile (ideally N is a multiple of 128)


def dc_module_forward(x, kp, *, M, D, P, S, num_layers, tn=None):
    """x: (B, M, L) -> pred: (B, M, T). Wrap in jax.jit at the call site."""
    B, Mx, L = x.shape
    assert Mx == M and L % S == 0
    N = L // S
    C = M * D
    MP = M * P
    T = kp["b_head"].shape[-1]
    assert kp["w_head"].shape == (N, D * T)

    # Frame extraction via P strided slices (no gather, no minor-dim transpose):
    # frames[b, m*P + p, n] = replicate_pad(x)[b, m, n*S + p]
    if P > S:
        xp = jnp.concatenate([x, jnp.repeat(x[..., -1:], P - S, axis=-1)], axis=-1)
    else:
        xp = x
    frames = jnp.stack(
        [jax.lax.slice_in_dim(xp, p, p + (N - 1) * S + 1, stride=S, axis=2)
         for p in range(P)], axis=2)                             # (B, M, P, N)
    frames = frames.reshape(B, MP, N).astype(jnp.bfloat16)

    if tn is None:
        tn = _pick_tn(N)
    assert N % tn == 0, "N must be a multiple of the time tile"

    nl3 = 3 * num_layers
    pred = pl.pallas_call(
        functools.partial(dc_kernel, num_layers=num_layers, M=M, D=D, T=T),
        out_shape=jax.ShapeDtypeStruct((B, M, T), jnp.float32),
        grid_spec=pltpu.PrefetchScalarGridSpec(
            num_scalar_prefetch=0,
            grid=(B, N // tn),
            in_specs=[
                pl.BlockSpec((1, MP, tn), lambda b, j: (b, 0, j)),     # frames tile
                pl.BlockSpec((C, MP), lambda b, j: (0, 0)),            # embed weight
                pl.BlockSpec((C, 1), lambda b, j: (0, 0)),             # embed bias
                pl.BlockSpec((nl3, C, C), lambda b, j: (0, 0, 0)),     # layer weights
                pl.BlockSpec((nl3, C, 1), lambda b, j: (0, 0, 0)),     # layer biases
                pl.BlockSpec((tn, D * T), lambda b, j: (j, 0)),        # head weight tile
                pl.BlockSpec((1, T), lambda b, j: (0, 0)),             # head bias
            ],
            out_specs=pl.BlockSpec((1, M, T), lambda b, j: (b, 0, 0)),
            scratch_shapes=[pltpu.VMEM((M, T), jnp.float32)],          # head accumulator
        ),
        compiler_params=pltpu.CompilerParams(
            dimension_semantics=("parallel", "arbitrary")),
    )(frames, kp["w_emb"], kp["b_emb"], kp["w_stack"], kp["b_stack"],
      kp["w_head"], kp["b_head"])
    return pred


# ------------------------- parameter setup (glue) ----------------------------

def init_params(key, M, D, P, S, L, T, r, num_layers):
    """Deterministic synthetic parameters matching the PyTorch module shapes."""
    C = M * D
    N = L // S
    keys = jax.random.split(key, 4 + num_layers)

    def nrm(k, shape, scale):
        return (scale * jax.random.normal(k, shape)).astype(jnp.float32)

    p = {
        "w_emb": nrm(keys[0], (D, P), 1.0 / np.sqrt(P)),       # Conv1d(1, D, P, stride=S)
        "b_emb": nrm(keys[1], (D,), 0.1),
        "w_head": nrm(keys[2], (T, D * N), 1.0 / np.sqrt(D * N)),  # Linear(D*N, T)
        "b_head": nrm(keys[3], (T,), 0.1),
        "layers": [],
    }
    for l in range(num_layers):
        ks = jax.random.split(keys[4 + l], 16)
        lp = {
            # gc_module(M, D, r, one=True): groups = M
            "w1a": nrm(ks[0], (r * C, D), 1.0 / np.sqrt(D)),
            "b1a": nrm(ks[1], (r * C,), 0.1),
            "g1": (1.0 + 0.1 * jax.random.normal(ks[2], (r * C,))).astype(jnp.float32),
            "be1": nrm(ks[3], (r * C,), 0.1),
            "m1": nrm(ks[4], (r * C,), 0.1),
            "v1": (1.0 + 0.5 * jax.random.uniform(ks[5], (r * C,))).astype(jnp.float32),
            "w1b": nrm(ks[6], (C, r * D), 1.0 / np.sqrt(r * D)),
            "b1b": nrm(ks[7], (C,), 0.1),
            # gc_module(M, D, r, one=False): groups = D
            "w2a": nrm(ks[8], (r * C, M), 1.0 / np.sqrt(M)),
            "b2a": nrm(ks[9], (r * C,), 0.1),
            "g2": (1.0 + 0.1 * jax.random.normal(ks[10], (r * C,))).astype(jnp.float32),
            "be2": nrm(ks[11], (r * C,), 0.1),
            "m2": nrm(ks[12], (r * C,), 0.1),
            "v2": (1.0 + 0.5 * jax.random.uniform(ks[13], (r * C,))).astype(jnp.float32),
            "w2b": nrm(ks[14], (C, r * M), 1.0 / np.sqrt(r * M)),
            "b2b": nrm(ks[15], (C,), 0.1),
        }
        p["layers"].append(lp)
    return p


def _block_diag_from_grouped(w, groups):
    # w: (Cout, Cin_per_group) — PyTorch grouped-conv weight with kernel dim squeezed.
    cout = w.shape[0]
    opg = cout // groups
    blocks = [w[g * opg:(g + 1) * opg] for g in range(groups)]
    return jax.scipy.linalg.block_diag(*blocks)


def build_kernel_params(p, M, D, P, r, eps=1e-5):
    """Fold BN (inference running stats), conv biases, the W2a@W1b chain and all
    (m d)<->(d m) permutations into per-layer (W1, Wmid, Wout, bias) sets, then
    conjugate everything into the (d m) channel basis used by the kernel."""
    assert r == 1, "reference BatchNorm shapes are only consistent for r == 1"
    C = M * D
    # permutation (m d) -> (d m): new channel d*M + m takes old channel m*D + d
    perm = np.arange(C).reshape(M, D).T.reshape(-1)
    Pm = jnp.eye(C, dtype=jnp.float32)[perm]

    w_list, b_list = [], []
    for lp in p["layers"]:
        W1a = _block_diag_from_grouped(lp["w1a"], M)
        W1b = _block_diag_from_grouped(lp["w1b"], M)
        W2a = _block_diag_from_grouped(lp["w2a"], D)
        W2b = _block_diag_from_grouped(lp["w2b"], D)
        s1 = lp["g1"] / jnp.sqrt(lp["v1"] + eps)
        t1 = lp["be1"] - lp["m1"] * s1
        s2 = lp["g2"] / jnp.sqrt(lp["v2"] + eps)
        t2 = lp["be2"] - lp["m2"] * s2
        W1 = s1[:, None] * W1a                          # BN1 ∘ pw_con1
        b1 = s1 * lp["b1a"] + t1
        Wmid = s2[:, None] * (W2a @ Pm @ W1b)           # BN2 ∘ pw_con1' ∘ perm ∘ pw_con2
        bmid = s2 * (W2a @ (Pm @ lp["b1b"]) + lp["b2a"]) + t2
        Wout = Pm.T @ W2b                               # perm^-1 ∘ pw_con2'
        bout = Pm.T @ lp["b2b"]
        # conjugate into the (d m) channel basis (pure host-side re-indexing)
        w_list += [W1[perm][:, perm], Wmid[perm][:, perm], Wout[perm][:, perm]]
        b_list += [b1[perm], bmid[perm], bout[perm]]

    Wemb = jax.scipy.linalg.block_diag(*([p["w_emb"]] * M))       # (C, M*P), (m d) rows
    bemb = jnp.tile(p["b_emb"], M)
    Wemb = Wemb[perm]                                             # -> (d m) rows
    bemb = bemb[perm]

    T = p["w_head"].shape[0]
    N = p["w_head"].shape[1] // D
    # Head weight packed lane-dense per time step: Whp[n, d*T + t] = W_head[t, d*N + n]
    Whp = p["w_head"].reshape(T, D, N).transpose(2, 1, 0).reshape(N, D * T)

    return dict(
        w_emb=Wemb.astype(jnp.bfloat16),
        b_emb=bemb.reshape(C, 1).astype(jnp.float32),
        w_stack=jnp.stack(w_list, axis=0).astype(jnp.bfloat16),           # (3*num_layers, C, C)
        b_stack=jnp.stack(b_list, axis=0)[:, :, None].astype(jnp.float32),  # (3*num_layers, C, 1)
        w_head=Whp.astype(jnp.bfloat16),                                   # (N, D*T)
        b_head=p["b_head"].reshape(1, -1).astype(jnp.float32),             # (1, T)
    )


# ----------------------- pure-JAX reference (literal) ------------------------

def reference_forward(x, p, *, M, D, P, S, num_layers, eps=1e-5):
    """Literal translation of DC_module.forward (BatchNorm in inference mode)."""
    B, _, L = x.shape
    N = L // S
    C = M * D
    hi = jax.lax.Precision.HIGHEST

    # Embedding: replicate-pad right by P-S, Conv1d(1, D, P, stride=S)
    xp = jnp.concatenate([x, jnp.repeat(x[..., -1:], P - S, axis=-1)], axis=-1)
    x_emb = jax.lax.conv_general_dilated(
        xp.reshape(B * M, 1, L + P - S), p["w_emb"][:, None, :],
        window_strides=(S,), padding="VALID",
        dimension_numbers=("NCH", "OIH", "NCH"), precision=hi)
    x_emb = (x_emb + p["b_emb"][None, :, None]).reshape(B, M, D, N)

    def grouped_pw(z, w, b, groups):
        cin, cout = z.shape[1], w.shape[0]
        zg = z.reshape(B, groups, cin // groups, N)
        wg = w.reshape(groups, cout // groups, cin // groups)
        y = jnp.einsum("goc,bgcn->bgon", wg, zg, precision=hi)
        return y.reshape(B, cout, N) + b[None, :, None]

    def bn_gelu(y, gamma, beta, mean, var):
        z = gamma[None, :, None] * (y - mean[None, :, None]) / jnp.sqrt(
            var[None, :, None] + eps) + beta[None, :, None]
        return 0.5 * z * (1.0 + jax.lax.erf(z * _INV_SQRT2))

    for lp in p["layers"]:
        xc = x_emb.reshape(B, C, N)
        h = grouped_pw(xc, lp["w1a"], lp["b1a"], M)
        h = bn_gelu(h, lp["g1"], lp["be1"], lp["m1"], lp["v1"])
        h = grouped_pw(h, lp["w1b"], lp["b1b"], M)
        h = h.reshape(B, M, D, N).transpose(0, 2, 1, 3).reshape(B, C, N)   # (m d)->(d m)
        g = grouped_pw(h, lp["w2a"], lp["b2a"], D)
        g = bn_gelu(g, lp["g2"], lp["be2"], lp["m2"], lp["v2"])
        g = grouped_pw(g, lp["w2b"], lp["b2b"], D)
        g = g.reshape(B, D, M, N).transpose(0, 2, 1, 3)                    # (d m)->(m d)
        x_emb = g + x_emb

    z = x_emb.reshape(B, M, D * N)
    return jnp.einsum("bmk,tk->bmt", z, p["w_head"], precision=hi) + p["b_head"][None, None, :]


if __name__ == "__main__":
    M, D, P, S = 4, 8, 8, 4
    kernel_size, r, num_layers = 51, 1, 2    # dw_conv (kernel_size) is unused in forward()
    B, L, T = 2, 2048, 16                    # N = L // S = 512; D*T = 128 (lane-dense head)

    key = jax.random.PRNGKey(0)
    kx, kparam = jax.random.split(key)
    x = jax.random.normal(kx, (B, M, L), dtype=jnp.float32)

    params = init_params(kparam, M, D, P, S, L, T, r, num_layers)
    kparams = build_kernel_params(params, M, D, P, r)

    forward = jax.jit(functools.partial(
        dc_module_forward, M=M, D=D, P=P, S=S, num_layers=num_layers))
    pred = forward(x, kparams)
    pred = jax.block_until_ready(pred)

    ref = reference_forward(x, params, M=M, D=D, P=P, S=S, num_layers=num_layers)
    np.testing.assert_allclose(np.asarray(pred), np.asarray(ref), rtol=3e-2, atol=3e-2)
    print("KERNEL_OK")
</pallas_src>

<mosaic_0001>
module attributes {stable_mosaic.version = 11 : i64} {
  func.func @dc_kernel(%arg0: i32, %arg1: i32, %arg2: memref<1x32x512xbf16, #tpu.memory_space<vmem>>, %arg3: memref<32x32xbf16, #tpu.memory_space<vmem>>, %arg4: memref<32x1xf32, #tpu.memory_space<vmem>>, %arg5: memref<6x32x32xbf16, #tpu.memory_space<vmem>>, %arg6: memref<6x32x1xf32, #tpu.memory_space<vmem>>, %arg7: memref<512x128xbf16, #tpu.memory_space<vmem>>, %arg8: memref<1x16xf32, #tpu.memory_space<vmem>>, %arg9: memref<1x4x16xf32, #tpu.memory_space<vmem>>, %arg10: memref<4x16xf32, #tpu.memory_space<vmem>>) attributes {dimension_semantics = [#tpu.dimension_semantics<parallel>, #tpu.dimension_semantics<arbitrary>], iteration_bounds = array<i64: 2, 1>, scalar_prefetch = 0 : i64, scratch_operands = 1 : i64, tpu.core_type = #tpu.core_type<tc>, window_params = [{transform_indices = @transform_0, window_bounds = array<i64: 1, 32, 512>}, {pipeline_mode = #tpu.pipeline_mode<synchronous>, transform_indices = @transform_1, window_bounds = array<i64: 32, 32>}, {pipeline_mode = #tpu.pipeline_mode<synchronous>, transform_indices = @transform_2, window_bounds = array<i64: 32, 1>}, {pipeline_mode = #tpu.pipeline_mode<synchronous>, transform_indices = @transform_3, window_bounds = array<i64: 6, 32, 32>}, {pipeline_mode = #tpu.pipeline_mode<synchronous>, transform_indices = @transform_4, window_bounds = array<i64: 6, 32, 1>}, {transform_indices = @transform_5, window_bounds = array<i64: 512, 128>}, {pipeline_mode = #tpu.pipeline_mode<synchronous>, transform_indices = @transform_6, window_bounds = array<i64: 1, 16>}, {transform_indices = @transform_7, window_bounds = array<i64: 1, 4, 16>}]} {
    %c0_i32 = arith.constant 0 : i32
    %0 = arith.cmpi eq, %arg1, %c0_i32 : i32
    %1 = arith.extui %0 : i1 to i32
    %c0_i32_0 = arith.constant 0 : i32
    %2 = arith.cmpi ne, %1, %c0_i32_0 : i32
    scf.if %2 {
      %cst_69 = arith.constant 0.000000e+00 : f32
      %136 = vector.broadcast %cst_69 : f32 to vector<4x16xf32>
      %c0_70 = arith.constant 0 : index
      %c0_71 = arith.constant 0 : index
      %137 = vector.load %arg10[%c0_70, %c0_71] : memref<4x16xf32, #tpu.memory_space<vmem>>, vector<4x16xf32>
      tpu.vector_store %arg10[%c0_70, %c0_71], %136 {strides = array<i32>} : memref<4x16xf32, #tpu.memory_space<vmem>>, vector<4x16xf32>,
    } else {
    }
    %c0 = arith.constant 0 : index
    %c0_1 = arith.constant 0 : index
    %c0_2 = arith.constant 0 : index
    %3 = vector.load %arg2[%c0, %c0_1, %c0_2] : memref<1x32x512xbf16, #tpu.memory_space<vmem>>, vector<1x32x512xbf16>
    %4 = vector.shape_cast %3 : vector<1x32x512xbf16> to vector<32x512xbf16>
    %c0_3 = arith.constant 0 : index
    %c0_4 = arith.constant 0 : index
    %5 = vector.load %arg3[%c0_3, %c0_4] : memref<32x32xbf16, #tpu.memory_space<vmem>>, vector<32x32xbf16>
    %cst = arith.constant dense<0.000000e+00> : vector<32x512xf32>
    %6 = tpu.matmul %5, %4, %cst {dimension_numbers = #tpu.dot_dimension_numbers<[1], [0], [0], [1], [0, 0, 1, 1], [], []>} : vector<32x32xbf16>, vector<32x512xbf16>, vector<32x512xf32> -> vector<32x512xf32>
    %c0_5 = arith.constant 0 : index
    %c0_6 = arith.constant 0 : index
    %7 = vector.load %arg4[%c0_5, %c0_6] : memref<32x1xf32, #tpu.memory_space<vmem>>, vector<32x1xf32>
    %8 = vector.broadcast %7 : vector<32x1xf32> to vector<32x512xf32>
    %9 = arith.addf %6, %8 : vector<32x512xf32>
    %c0_7 = arith.constant 0 : index
    %c0_8 = arith.constant 0 : index
    %c0_9 = arith.constant 0 : index
    %10 = vector.load %arg5[%c0_7, %c0_8, %c0_9] : memref<6x32x32xbf16, #tpu.memory_space<vmem>>, vector<1x32x32xbf16>
    %11 = vector.shape_cast %10 : vector<1x32x32xbf16> to vector<32x32xbf16>
    %12 = arith.truncf %9 : vector<32x512xf32> to vector<32x512xbf16>
    %cst_10 = arith.constant dense<0.000000e+00> : vector<32x512xf32>
    %13 = tpu.matmul %11, %12, %cst_10 {dimension_numbers = #tpu.dot_dimension_numbers<[1], [0], [0], [1], [0, 0, 1, 1], [], []>} : vector<32x32xbf16>, vector<32x512xbf16>, vector<32x512xf32> -> vector<32x512xf32>
    %c0_11 = arith.constant 0 : index
    %c0_12 = arith.constant 0 : index
    %c0_13 = arith.constant 0 : index
    %14 = vector.load %arg6[%c0_11, %c0_12, %c0_13] : memref<6x32x1xf32, #tpu.memory_space<vmem>>, vector<1x32x1xf32>
    %15 = vector.shape_cast %14 : vector<1x32x1xf32> to vector<32x1xf32>
    %16 = vector.broadcast %15 : vector<32x1xf32> to vector<32x512xf32>
    %17 = arith.addf %13, %16 : vector<32x512xf32>
    %cst_14 = arith.constant 5.000000e-01 : f32
    %18 = vector.broadcast %cst_14 : f32 to vector<32x512xf32>
    %19 = arith.mulf %18, %17 : vector<32x512xf32>
    %cst_15 = arith.constant 4.471500e-02 : f32
    %20 = vector.broadcast %cst_15 : f32 to vector<32x512xf32>
    %21 = arith.mulf %20, %17 : vector<32x512xf32>
    %22 = arith.mulf %21, %17 : vector<32x512xf32>
    %23 = arith.mulf %22, %17 : vector<32x512xf32>
    %24 = arith.addf %17, %23 : vector<32x512xf32>
    %cst_16 = arith.constant 0.797884583 : f32
    %25 = vector.broadcast %cst_16 : f32 to vector<32x512xf32>
    %26 = arith.mulf %25, %24 : vector<32x512xf32>
    %27 = math.tanh %26 : vector<32x512xf32>
    %cst_17 = arith.constant 1.000000e+00 : f32
    %28 = vector.broadcast %cst_17 : f32 to vector<32x512xf32>
    %29 = arith.addf %28, %27 : vector<32x512xf32>
    %30 = arith.mulf %19, %29 : vector<32x512xf32>
    %c1 = arith.constant 1 : index
    %c0_18 = arith.constant 0 : index
    %c0_19 = arith.constant 0 : index
    %31 = vector.load %arg5[%c1, %c0_18, %c0_19] : memref<6x32x32xbf16, #tpu.memory_space<vmem>>, vector<1x32x32xbf16>
    %32 = vector.shape_cast %31 : vector<1x32x32xbf16> to vector<32x32xbf16>
    %33 = arith.truncf %30 : vector<32x512xf32> to vector<32x512xbf16>
    %cst_20 = arith.constant dense<0.000000e+00> : vector<32x512xf32>
    %34 = tpu.matmul %32, %33, %cst_20 {dimension_numbers = #tpu.dot_dimension_numbers<[1], [0], [0], [1], [0, 0, 1, 1], [], []>} : vector<32x32xbf16>, vector<32x512xbf16>, vector<32x512xf32> -> vector<32x512xf32>
    %c1_21 = arith.constant 1 : index
    %c0_22 = arith.constant 0 : index
    %c0_23 = arith.constant 0 : index
    %35 = vector.load %arg6[%c1_21, %c0_22, %c0_23] : memref<6x32x1xf32, #tpu.memory_space<vmem>>, vector<1x32x1xf32>
    %36 = vector.shape_cast %35 : vector<1x32x1xf32> to vector<32x1xf32>
    %37 = vector.broadcast %36 : vector<32x1xf32> to vector<32x512xf32>
    %38 = arith.addf %34, %37 : vector<32x512xf32>
    %cst_24 = arith.constant 5.000000e-01 : f32
    %39 = vector.broadcast %cst_24 : f32 to vector<32x512xf32>
    %40 = arith.mulf %39, %38 : vector<32x512xf32>
    %cst_25 = arith.constant 4.471500e-02 : f32
    %41 = vector.broadcast %cst_25 : f32 to vector<32x512xf32>
    %42 = arith.mulf %41, %38 : vector<32x512xf32>
    %43 = arith.mulf %42, %38 : vector<32x512xf32>
    %44 = arith.mulf %43, %38 : vector<32x512xf32>
    %45 = arith.addf %38, %44 : vector<32x512xf32>
    %cst_26 = arith.constant 0.797884583 : f32
    %46 = vector.broadcast %cst_26 : f32 to vector<32x512xf32>
    %47 = arith.mulf %46, %45 : vector<32x512xf32>
    %48 = math.tanh %47 : vector<32x512xf32>
    %cst_27 = arith.constant 1.000000e+00 : f32
    %49 = vector.broadcast %cst_27 : f32 to vector<32x512xf32>
    %50 = arith.addf %49, %48 : vector<32x512xf32>
    %51 = arith.mulf %40, %50 : vector<32x512xf32>
    %c2 = arith.constant 2 : index
    %c0_28 = arith.constant 0 : index
    %c0_29 = arith.constant 0 : index
    %52 = vector.load %arg5[%c2, %c0_28, %c0_29] : memref<6x32x32xbf16, #tpu.memory_space<vmem>>, vector<1x32x32xbf16>
    %53 = vector.shape_cast %52 : vector<1x32x32xbf16> to vector<32x32xbf16>
    %54 = arith.truncf %51 : vector<32x512xf32> to vector<32x512xbf16>
    %cst_30 = arith.constant dense<0.000000e+00> : vector<32x512xf32>
    %55 = tpu.matmul %53, %54, %cst_30 {dimension_numbers = #tpu.dot_dimension_numbers<[1], [0], [0], [1], [0, 0, 1, 1], [], []>} : vector<32x32xbf16>, vector<32x512xbf16>, vector<32x512xf32> -> vector<32x512xf32>
    %c2_31 = arith.constant 2 : index
    %c0_32 = arith.constant 0 : index
    %c0_33 = arith.constant 0 : index
    %56 = vector.load %arg6[%c2_31, %c0_32, %c0_33] : memref<6x32x1xf32, #tpu.memory_space<vmem>>, vector<1x32x1xf32>
    %57 = vector.shape_cast %56 : vector<1x32x1xf32> to vector<32x1xf32>
    %58 = vector.broadcast %57 : vector<32x1xf32> to vector<32x512xf32>
    %59 = arith.addf %55, %58 : vector<32x512xf32>
    %60 = arith.addf %59, %9 : vector<32x512xf32>
    %c3 = arith.constant 3 : index
    %c0_34 = arith.constant 0 : index
    %c0_35 = arith.constant 0 : index
    %61 = vector.load %arg5[%c3, %c0_34, %c0_35] : memref<6x32x32xbf16, #tpu.memory_space<vmem>>, vector<1x32x32xbf16>
    %62 = vector.shape_cast %61 : vector<1x32x32xbf16> to vector<32x32xbf16>
    %63 = arith.truncf %60 : vector<32x512xf32> to vector<32x512xbf16>
    %cst_36 = arith.constant dense<0.000000e+00> : vector<32x512xf32>
    %64 = tpu.matmul %62, %63, %cst_36 {dimension_numbers = #tpu.dot_dimension_numbers<[1], [0], [0], [1], [0, 0, 1, 1], [], []>} : vector<32x32xbf16>, vector<32x512xbf16>, vector<32x512xf32> -> vector<32x512xf32>
    %c3_37 = arith.constant 3 : index
    %c0_38 = arith.constant 0 : index
    %c0_39 = arith.constant 0 : index
    %65 = vector.load %arg6[%c3_37, %c0_38, %c0_39] : memref<6x32x1xf32, #tpu.memory_space<vmem>>, vector<1x32x1xf32>
    %66 = vector.shape_cast %65 : vector<1x32x1xf32> to vector<32x1xf32>
    %67 = vector.broadcast %66 : vector<32x1xf32> to vector<32x512xf32>
    %68 = arith.addf %64, %67 : vector<32x512xf32>
    %cst_40 = arith.constant 5.000000e-01 : f32
    %69 = vector.broadcast %cst_40 : f32 to vector<32x512xf32>
    %70 = arith.mulf %69, %68 : vector<32x512xf32>
    %cst_41 = arith.constant 4.471500e-02 : f32
    %71 = vector.broadcast %cst_41 : f32 to vector<32x512xf32>
    %72 = arith.mulf %71, %68 : vector<32x512xf32>
    %73 = arith.mulf %72, %68 : vector<32x512xf32>
    %74 = arith.mulf %73, %68 : vector<32x512xf32>
    %75 = arith.addf %68, %74 : vector<32x512xf32>
    %cst_42 = arith.constant 0.797884583 : f32
    %76 = vector.broadcast %cst_42 : f32 to vector<32x512xf32>
    %77 = arith.mulf %76, %75 : vector<32x512xf32>
    %78 = math.tanh %77 : vector<32x512xf32>
    %cst_43 = arith.constant 1.000000e+00 : f32
    %79 = vector.broadcast %cst_43 : f32 to vector<32x512xf32>
    %80 = arith.addf %79, %78 : vector<32x512xf32>
    %81 = arith.mulf %70, %80 : vector<32x512xf32>
    %c4 = arith.constant 4 : index
    %c0_44 = arith.constant 0 : index
    %c0_45 = arith.constant 0 : index
    %82 = vector.load %arg5[%c4, %c0_44, %c0_45] : memref<6x32x32xbf16, #tpu.memory_space<vmem>>, vector<1x32x32xbf16>
    %83 = vector.shape_cast %82 : vector<1x32x32xbf16> to vector<32x32xbf16>
    %84 = arith.truncf %81 : vector<32x512xf32> to vector<32x512xbf16>
    %cst_46 = arith.constant dense<0.000000e+00> : vector<32x512xf32>
    %85 = tpu.matmul %83, %84, %cst_46 {dimension_numbers = #tpu.dot_dimension_numbers<[1], [0], [0], [1], [0, 0, 1, 1], [], []>} : vector<32x32xbf16>, vector<32x512xbf16>, vector<32x512xf32> -> vector<32x512xf32>
    %c4_47 = arith.constant 4 : index
    %c0_48 = arith.constant 0 : index
    %c0_49 = arith.constant 0 : index
    %86 = vector.load %arg6[%c4_47, %c0_48, %c0_49] : memref<6x32x1xf32, #tpu.memory_space<vmem>>, vector<1x32x1xf32>
    %87 = vector.shape_cast %86 : vector<1x32x1xf32> to vector<32x1xf32>
    %88 = vector.broadcast %87 : vector<32x1xf32> to vector<32x512xf32>
    %89 = arith.addf %85, %88 : vector<32x512xf32>
    %cst_50 = arith.constant 5.000000e-01 : f32
    %90 = vector.broadcast %cst_50 : f32 to vector<32x512xf32>
    %91 = arith.mulf %90, %89 : vector<32x512xf32>
    %cst_51 = arith.constant 4.471500e-02 : f32
    %92 = vector.broadcast %cst_51 : f32 to vector<32x512xf32>
    %93 = arith.mulf %92, %89 : vector<32x512xf32>
    %94 = arith.mulf %93, %89 : vector<32x512xf32>
    %95 = arith.mulf %94, %89 : vector<32x512xf32>
    %96 = arith.addf %89, %95 : vector<32x512xf32>
    %cst_52 = arith.constant 0.797884583 : f32
    %97 = vector.broadcast %cst_52 : f32 to vector<32x512xf32>
    %98 = arith.mulf %97, %96 : vector<32x512xf32>
    %99 = math.tanh %98 : vector<32x512xf32>
    %cst_53 = arith.constant 1.000000e+00 : f32
    %100 = vector.broadcast %cst_53 : f32 to vector<32x512xf32>
    %101 = arith.addf %100, %99 : vector<32x512xf32>
    %102 = arith.mulf %91, %101 : vector<32x512xf32>
    %c5 = arith.constant 5 : index
    %c0_54 = arith.constant 0 : index
    %c0_55 = arith.constant 0 : index
    %103 = vector.load %arg5[%c5, %c0_54, %c0_55] : memref<6x32x32xbf16, #tpu.memory_space<vmem>>, vector<1x32x32xbf16>
    %104 = vector.shape_cast %103 : vector<1x32x32xbf16> to vector<32x32xbf16>
    %105 = arith.truncf %102 : vector<32x512xf32> to vector<32x512xbf16>
    %cst_56 = arith.constant dense<0.000000e+00> : vector<32x512xf32>
    %106 = tpu.matmul %104, %105, %cst_56 {dimension_numbers = #tpu.dot_dimension_numbers<[1], [0], [0], [1], [0, 0, 1, 1], [], []>} : vector<32x32xbf16>, vector<32x512xbf16>, vector<32x512xf32> -> vector<32x512xf32>
    %c5_57 = arith.constant 5 : index
    %c0_58 = arith.constant 0 : index
    %c0_59 = arith.constant 0 : index
    %107 = vector.load %arg6[%c5_57, %c0_58, %c0_59] : memref<6x32x1xf32, #tpu.memory_space<vmem>>, vector<1x32x1xf32>
    %108 = vector.shape_cast %107 : vector<1x32x1xf32> to vector<32x1xf32>
    %109 = vector.broadcast %108 : vector<32x1xf32> to vector<32x512xf32>
    %110 = arith.addf %106, %109 : vector<32x512xf32>
    %111 = arith.addf %110, %60 : vector<32x512xf32>
    %112 = arith.truncf %111 : vector<32x512xf32> to vector<32x512xbf16>
    %c0_60 = arith.constant 0 : index
    %c0_61 = arith.constant 0 : index
    %113 = vector.load %arg7[%c0_60, %c0_61] : memref<512x128xbf16, #tpu.memory_space<vmem>>, vector<512x128xbf16>
    %cst_62 = arith.constant dense<0.000000e+00> : vector<32x128xf32>
    %114 = tpu.matmul %112, %113, %cst_62 {dimension_numbers = #tpu.dot_dimension_numbers<[1], [0], [0], [1], [0, 0, 1, 1], [], []>} : vector<32x512xbf16>, vector<512x128xbf16>, vector<32x128xf32> -> vector<32x128xf32>
    %c0_63 = arith.constant 0 : index
    %c0_64 = arith.constant 0 : index
    %115 = vector.load %arg10[%c0_63, %c0_64] : memref<4x16xf32, #tpu.memory_space<vmem>>, vector<4x16xf32>
    %116 = vector.extract_strided_slice %114 {offsets = [0, 0], sizes = [4, 16], strides = [1, 1]} : vector<32x128xf32> to vector<4x16xf32>
    %117 = arith.addf %115, %116 : vector<4x16xf32>
    %118 = vector.extract_strided_slice %114 {offsets = [4, 16], sizes = [4, 16], strides = [1, 1]} : vector<32x128xf32> to vector<4x16xf32>
    %119 = arith.addf %117, %118 : vector<4x16xf32>
    %120 = vector.extract_strided_slice %114 {offsets = [8, 32], sizes = [4, 16], strides = [1, 1]} : vector<32x128xf32> to vector<4x16xf32>
    %121 = arith.addf %119, %120 : vector<4x16xf32>
    %122 = vector.extract_strided_slice %114 {offsets = [12, 48], sizes = [4, 16], strides = [1, 1]} : vector<32x128xf32> to vector<4x16xf32>
    %123 = arith.addf %121, %122 : vector<4x16xf32>
    %124 = vector.extract_strided_slice %114 {offsets = [16, 64], sizes = [4, 16], strides = [1, 1]} : vector<32x128xf32> to vector<4x16xf32>
    %125 = arith.addf %123, %124 : vector<4x16xf32>
    %126 = vector.extract_strided_slice %114 {offsets = [20, 80], sizes = [4, 16], strides = [1, 1]} : vector<32x128xf32> to vector<4x16xf32>
    %127 = arith.addf %125, %126 : vector<4x16xf32>
    %128 = vector.extract_strided_slice %114 {offsets = [24, 96], sizes = [4, 16], strides = [1, 1]} : vector<32x128xf32> to vector<4x16xf32>
    %129 = arith.addf %127, %128 : vector<4x16xf32>
    %130 = vector.extract_strided_slice %114 {offsets = [28, 112], sizes = [4, 16], strides = [1, 1]} : vector<32x128xf32> to vector<4x16xf32>
    %131 = arith.addf %129, %130 : vector<4x16xf32>
    %c0_65 = arith.constant 0 : index
    %c0_66 = arith.constant 0 : index
    %132 = vector.load %arg10[%c0_65, %c0_66] : memref<4x16xf32, #tpu.memory_space<vmem>>, vector<4x16xf32>
    tpu.vector_store %arg10[%c0_65, %c0_66], %131 {strides = array<i32>} : memref<4x16xf32, #tpu.memory_space<vmem>>, vector<4x16xf32>,
    %c0_i32_67 = arith.constant 0 : i32
    %133 = arith.cmpi eq, %arg1, %c0_i32_67 : i32
    %134 = arith.extui %133 : i1 to i32
    %c0_i32_68 = arith.constant 0 : i32
    %135 = arith.cmpi ne, %134, %c0_i32_68 : i32
    scf.if %135 {
      %c0_69 = arith.constant 0 : index
      %c0_70 = arith.constant 0 : index
      %136 = vector.load %arg10[%c0_69, %c0_70] : memref<4x16xf32, #tpu.memory_space<vmem>>, vector<4x16xf32>
      %c0_71 = arith.constant 0 : index
      %c0_72 = arith.constant 0 : index
      %137 = vector.load %arg8[%c0_71, %c0_72] : memref<1x16xf32, #tpu.memory_space<vmem>>, vector<1x16xf32>
      %138 = vector.broadcast %137 : vector<1x16xf32> to vector<4x16xf32>
      %139 = arith.addf %136, %138 : vector<4x16xf32>
      %c0_73 = arith.constant 0 : index
      %c0_74 = arith.constant 0 : index
      %c0_75 = arith.constant 0 : index
      %140 = vector.load %arg9[%c0_73, %c0_74, %c0_75] : memref<1x4x16xf32, #tpu.memory_space<vmem>>, vector<1x4x16xf32>
      %141 = vector.shape_cast %140 : vector<1x4x16xf32> to vector<4x16xf32>
      %142 = vector.shape_cast %139 : vector<4x16xf32> to vector<1x4x16xf32>
      tpu.vector_store %arg9[%c0_73, %c0_74, %c0_75], %142 {strides = array<i32>} : memref<1x4x16xf32, #tpu.memory_space<vmem>>, vector<1x4x16xf32>,
    } else {
    }
    return
  }
  func.func @transform_0(%arg0: i32, %arg1: i32) -> (i32, i32, i32) {
    %c0_i32 = arith.constant 0 : i32
    %c0_i32_0 = arith.constant 0 : i32
    return %arg0, %c0_i32, %arg1 : i32, i32, i32
  }
  func.func @transform_1(%arg0: i32, %arg1: i32) -> (i32, i32) {
    %c0_i32 = arith.constant 0 : i32
    %c0_i32_0 = arith.constant 0 : i32
    %c0_i32_1 = arith.constant 0 : i32
    return %c0_i32, %c0_i32_0 : i32, i32
  }
  func.func @transform_2(%arg0: i32, %arg1: i32) -> (i32, i32) {
    %c0_i32 = arith.constant 0 : i32
    %c0_i32_0 = arith.constant 0 : i32
    %c0_i32_1 = arith.constant 0 : i32
    return %c0_i32, %c0_i32_0 : i32, i32
  }
  func.func @transform_3(%arg0: i32, %arg1: i32) -> (i32, i32, i32) {
    %c0_i32 = arith.constant 0 : i32
    %c0_i32_0 = arith.constant 0 : i32
    %c0_i32_1 = arith.constant 0 : i32
    %c0_i32_2 = arith.constant 0 : i32
    return %c0_i32, %c0_i32_0, %c0_i32_1 : i32, i32, i32
  }
  func.func @transform_4(%arg0: i32, %arg1: i32) -> (i32, i32, i32) {
    %c0_i32 = arith.constant 0 : i32
    %c0_i32_0 = arith.constant 0 : i32
    %c0_i32_1 = arith.constant 0 : i32
    %c0_i32_2 = arith.constant 0 : i32
    return %c0_i32, %c0_i32_0, %c0_i32_1 : i32, i32, i32
  }
  func.func @transform_5(%arg0: i32, %arg1: i32) -> (i32, i32) {
    %c0_i32 = arith.constant 0 : i32
    %c0_i32_0 = arith.constant 0 : i32
    return %arg1, %c0_i32 : i32, i32
  }
  func.func @transform_6(%arg0: i32, %arg1: i32) -> (i32, i32) {
    %c0_i32 = arith.constant 0 : i32
    %c0_i32_0 = arith.constant 0 : i32
    %c0_i32_1 = arith.constant 0 : i32
    return %c0_i32, %c0_i32_0 : i32, i32
  }
  func.func @transform_7(%arg0: i32, %arg1: i32) -> (i32, i32, i32) {
    %c0_i32 = arith.constant 0 : i32
    %c0_i32_0 = arith.constant 0 : i32
    %c0_i32_1 = arith.constant 0 : i32
    return %arg0, %c0_i32, %c0_i32_0 : i32, i32, i32
  }
}

</mosaic_0001>

<llo_original>
// kernel: dc_module_forward.1
$region0: #{dc_module_forward.1}
  #allocation0 [shape = 'u32[]', space=smem, size = 0x4, offset = 0x4, fixed_abs, tag = 'smem constant byte address 0x4 - core index']
  #allocation1 [shape = 'u32[144,128]{1,0:T(1,128)}', space=vmem, size = 0x12000, scoped, tag = 'internal scratch']
  #allocation2 [shape = 'f32[4,16]{1,0:T(4,128)}', space=vmem, size = 0x800, scoped, tag = 'scratch operand']
  %s0 = inlined_call_operand.vmem [shape: bf16[2,32,512], index: 0, kind: input, shape index: {}]
  %s1 = inlined_call_operand.vmem [shape: bf16[32,32], index: 1, kind: input, shape index: {}]
  %s2 = inlined_call_operand.vmem [shape: f32[32,1], index: 2, kind: input, shape index: {}]
  %s3 = inlined_call_operand.vmem [shape: bf16[6,32,32], index: 3, kind: input, shape index: {}]
  %s4 = inlined_call_operand.vmem [shape: f32[6,32,1], index: 4, kind: input, shape index: {}]
  %s5 = inlined_call_operand.vmem [shape: bf16[512,128], index: 5, kind: input, shape index: {}]
  %s6 = inlined_call_operand.vmem [shape: f32[1,16], index: 6, kind: input, shape index: {}]
  %s7 = inlined_call_operand.hbm [shape: f32[2,4,16], index: 7, kind: output, shape index: {}]
  %s8 = sld [smem:[#allocation0]]
  $region69: #{dc_module_forward.1} parent=0
    _
  %s10 = ssub.s32 1, %s8
  %s11 = scalar_select 0, %s10, %s8
  $region1: #{dc_module_forward.1} parent=0
    #allocation3 [shape = 'u8[4096]{0}', space=vmem, size = 0x1000, scoped, tag = 'output window, operand 0']
    #allocation4 [shape = 's32[2]{0}', space=sflag, size = 0x8, scoped, tag = 'scoped memory for dc_module_forward.1']
    %12 = vsyncpa [#allocation4], 0
    %s13 = scalar_lea.sflag [#allocation4], 1
    %14 = vsyncpa %s13, 0
    loop: start=0, step=1, limit=4
    $region2: #{dc_module_forward.1} parent=1 // loop_pre_header
      _
    $region3: #{dc_module_forward.1} parent=1 // loop_header
      %s16 = sphi 0, %s20
      %p17 = scmp.ge.s32.totalorder %s16, 4
      %s23 = sphi 0, %s35
      %s24 = sphi 0, %s31
      %s25 = sphi 0, %s23
      %s26 = sphi 0, %s24
      %s27 = sphi 0, %s25
      %s28 = sphi 0, %s26
      %s40 = sphi 0, %s42
      %s43 = sphi 0, %s40
      %s44 = sphi 0, %s43
      %s60 = sphi 0, %s44
      %s64 = sphi 0, %s64
      %s66 = sphi 0, %s64
      %s67 = sphi 0, %s66
      %s81 = sphi 0, %s67
      %s85 = sphi 0, %s85
      %s87 = sphi 0, %s85
      %s88 = sphi 0, %s87
      %s102 = sphi 0, %s88
      %s106 = sphi 0, %s106
      %s108 = sphi 0, %s106
      %s109 = sphi 0, %s108
      %s123 = sphi 0, %s109
      %s127 = sphi 0, %s127
      %s129 = sphi 0, %s127
      %s130 = sphi 0, %s129
      %s144 = sphi 0, %s130
      %s150 = sphi 0, %s152
      %s153 = sphi 0, %s150
      %s154 = sphi 0, %s153
      %s170 = sphi 0, %s154
      %s174 = sphi 0, %s174
      %s176 = sphi 0, %s174
      %s177 = sphi 0, %s176
      %s191 = sphi 0, %s177
      %s197 = sphi 0, %s199
      %s200 = sphi 0, %s197
      %s201 = sphi 0, %s200
      %s217 = sphi 0, %s201
    $region4: #{dc_module_forward.1} parent=1 // loop_header_branch
      %19 = sbr.rel (%p17) target = $region8
    $region5: #{dc_module_forward.1} parent=1 // loop_body
      %s21 = ssub.s32 %s16, 1
      %s22 = ssub.s32 %s16, 2
      %s29 = sadd.s32 1, %s24
      %p30 = scmp.ge.s32.totalorder %s29, 1
      %s31 = scalar_select %p30, 0, %s29
      %s32 = sadd.s32 1, %s23
      %s33 = scalar_select %p30, %s32, %s23
      %p34 = scmp.ge.s32.totalorder %s33, 2
      %s35 = scalar_select %p34, 0, %s33
      %s36 = ssub.s32 %s23, %s35
      %s37 = ssub.s32 %s24, %s31
      %s38 = sor.u32 %s36, %s37
      %p39 = scmp.eq.s32.totalorder %s38, 0
      %s41 = sadd.s32 %s40, 1
      %s42 = scalar_select %p39, %s40, %s41
      %p45 = pneg %p39
      %p46 = scmp.eq.s32.totalorder %s16, 1
      %p47 = por %p45, %p46
      %p48 = scmp.ne.s32.totalorder %s40, %s43
      %p49 = scmp.eq.s32.totalorder %s16, 0
      %p50 = por %p48, %p49
      %p51 = scmp.ne.s32.totalorder %s40, %s43
      %p52 = scmp.eq.s32.totalorder %s21, 1
      %p53 = por %p51, %p52
      %p54 = scmp.ne.s32.totalorder %s43, %s44
      %p55 = scmp.eq.s32.totalorder %s21, 0
      %p56 = por %p54, %p55
      %p57 = scmp.ne.s32.totalorder %s43, %s44
      %p58 = scmp.eq.s32.totalorder %s22, 1
      %p59 = por %p57, %p58
      %p61 = scmp.ne.s32.totalorder %s44, %s60
      %p62 = scmp.eq.s32.totalorder %s22, 0
      %p63 = por %p61, %p62
      %s65 = sadd.s32 %s64, 1
      %p68 = scmp.eq.s32.totalorder %s16, 1
      %p69 = scmp.ne.s32.totalorder %s64, %s66
      %p70 = scmp.eq.s32.totalorder %s16, 0
      %p71 = por %p69, %p70
      %p72 = scmp.ne.s32.totalorder %s64, %s66
      %p73 = scmp.eq.s32.totalorder %s21, 1
      %p74 = por %p72, %p73
      %p75 = scmp.ne.s32.totalorder %s66, %s67
      %p76 = scmp.eq.s32.totalorder %s21, 0
      %p77 = por %p75, %p76
      %p78 = scmp.ne.s32.totalorder %s66, %s67
      %p79 = scmp.eq.s32.totalorder %s22, 1
      %p80 = por %p78, %p79
      %p82 = scmp.ne.s32.totalorder %s67, %s81
      %p83 = scmp.eq.s32.totalorder %s22, 0
      %p84 = por %p82, %p83
      %s86 = sadd.s32 %s85, 1
      %p89 = scmp.eq.s32.totalorder %s16, 1
      %p90 = scmp.ne.s32.totalorder %s85, %s87
      %p91 = scmp.eq.s32.totalorder %s16, 0
      %p92 = por %p90, %p91
      %p93 = scmp.ne.s32.totalorder %s85, %s87
      %p94 = scmp.eq.s32.totalorder %s21, 1
      %p95 = por %p93, %p94
      %p96 = scmp.ne.s32.totalorder %s87, %s88
      %p97 = scmp.eq.s32.totalorder %s21, 0
      %p98 = por %p96, %p97
      %p99 = scmp.ne.s32.totalorder %s87, %s88
      %p100 = scmp.eq.s32.totalorder %s22, 1
      %p101 = por %p99, %p100
      %p103 = scmp.ne.s32.totalorder %s88, %s102
      %p104 = scmp.eq.s32.totalorder %s22, 0
      %p105 = por %p103, %p104
      %s107 = sadd.s32 %s106, 1
      %p110 = scmp.eq.s32.totalorder %s16, 1
      %p111 = scmp.ne.s32.totalorder %s106, %s108
      %p112 = scmp.eq.s32.totalorder %s16, 0
      %p113 = por %p111, %p112
      %p114 = scmp.ne.s32.totalorder %s106, %s108
      %p115 = scmp.eq.s32.totalorder %s21, 1
      %p116 = por %p114, %p115
      %p117 = scmp.ne.s32.totalorder %s108, %s109
      %p118 = scmp.eq.s32.totalorder %s21, 0
      %p119 = por %p117, %p118
      %p120 = scmp.ne.s32.totalorder %s108, %s109
      %p121 = scmp.eq.s32.totalorder %s22, 1
      %p122 = por %p120, %p121
      %p124 = scmp.ne.s32.totalorder %s109, %s123
      %p125 = scmp.eq.s32.totalorder %s22, 0
      %p126 = por %p124, %p125
      %s128 = sadd.s32 %s127, 1
      %p131 = scmp.eq.s32.totalorder %s16, 1
      %p132 = scmp.ne.s32.totalorder %s127, %s129
      %p133 = scmp.eq.s32.totalorder %s16, 0
      %p134 = por %p132, %p133
      %p135 = scmp.ne.s32.totalorder %s127, %s129
      %p136 = scmp.eq.s32.totalorder %s21, 1
      %p137 = por %p135, %p136
      %p138 = scmp.ne.s32.totalorder %s129, %s130
      %p139 = scmp.eq.s32.totalorder %s21, 0
      %p140 = por %p138, %p139
      %p141 = scmp.ne.s32.totalorder %s129, %s130
      %p142 = scmp.eq.s32.totalorder %s22, 1
      %p143 = por %p141, %p142
      %p145 = scmp.ne.s32.totalorder %s130, %s144
      %p146 = scmp.eq.s32.totalorder %s22, 0
      %p147 = por %p145, %p146
      %s148 = ssub.s32 %s24, %s31
      %p149 = scmp.eq.s32.totalorder %s148, 0
      %s151 = sadd.s32 %s150, 1
      %s152 = scalar_select %p149, %s150, %s151
      %p155 = pneg %p149
      %p156 = scmp.eq.s32.totalorder %s16, 1
      %p157 = por %p155, %p156
      %p158 = scmp.ne.s32.totalorder %s150, %s153
      %p159 = scmp.eq.s32.totalorder %s16, 0
      %p160 = por %p158, %p159
      %p161 = scmp.ne.s32.totalorder %s150, %s153
      %p162 = scmp.eq.s32.totalorder %s21, 1
      %p163 = por %p161, %p162
      %p164 = scmp.ne.s32.totalorder %s153, %s154
      %p165 = scmp.eq.s32.totalorder %s21, 0
      %p166 = por %p164, %p165
      %p167 = scmp.ne.s32.totalorder %s153, %s154
      %p168 = scmp.eq.s32.totalorder %s22, 1
      %p169 = por %p167, %p168
      %p171 = scmp.ne.s32.totalorder %s154, %s170
      %p172 = scmp.eq.s32.totalorder %s22, 0
      %p173 = por %p171, %p172
      %s175 = sadd.s32 %s174, 1
      %p178 = scmp.eq.s32.totalorder %s16, 1
      %p179 = scmp.ne.s32.totalorder %s174, %s176
      %p180 = scmp.eq.s32.totalorder %s16, 0
      %p181 = por %p179, %p180
      %p182 = scmp.ne.s32.totalorder %s174, %s176
      %p183 = scmp.eq.s32.totalorder %s21, 1
      %p184 = por %p182, %p183
      %p185 = scmp.ne.s32.totalorder %s176, %s177
      %p186 = scmp.eq.s32.totalorder %s21, 0
      %p187 = por %p185, %p186
      %p188 = scmp.ne.s32.totalorder %s176, %s177
      %p189 = scmp.eq.s32.totalorder %s22, 1
      %p190 = por %p188, %p189
      %p192 = scmp.ne.s32.totalorder %s177, %s191
      %p193 = scmp.eq.s32.totalorder %s22, 0
      %p194 = por %p192, %p193
      %s195 = ssub.s32 %s23, %s35
      %p196 = scmp.eq.s32.totalorder %s195, 0
      %s198 = sadd.s32 %s197, 1
      %s199 = scalar_select %p196, %s197, %s198
      %p202 = pneg %p196
      %p203 = scmp.eq.s32.totalorder %s16, 1
      %p204 = por %p202, %p203
      %p205 = scmp.ne.s32.totalorder %s197, %s200
      %p206 = scmp.eq.s32.totalorder %s16, 0
      %p207 = por %p205, %p206
      %p208 = scmp.ne.s32.totalorder %s197, %s200
      %p209 = scmp.eq.s32.totalorder %s21, 1
      %p210 = por %p208, %p209
      %p211 = scmp.ne.s32.totalorder %s200, %s201
      %p212 = scmp.eq.s32.totalorder %s21, 0
      %p213 = por %p211, %p212
      %p214 = scmp.ne.s32.totalorder %s200, %s201
      %p215 = scmp.eq.s32.totalorder %s22, 1
      %p216 = por %p214, %p215
      %p218 = scmp.ne.s32.totalorder %s201, %s217
      %p219 = scmp.eq.s32.totalorder %s22, 0
      %p220 = por %p218, %p219
      %p221 = scmp.le.s32.totalorder 1, %s16
      %p222 = scmp.lt.s32.totalorder %s16, 3
      %p223 = pnand %p221, %p222
      %p224 = pneg %p223
      // Predicated region
      $region9: #{dc_module_forward.1} parent=5 // pred_check
        _
      $region10: #{dc_module_forward.1} parent=5 // pred_check_branch
        %226 = sbr.rel (%p223) target = $region12
      $region11: #{dc_module_forward.1} parent=5 // pred_region
        %s227 = ssub.s32 %s16, 1
        // Predicated region
        $region13: #{dc_module_forward.1} parent=11 // pred_check
          %p228 = pneg %p77
        $region14: #{dc_module_forward.1} parent=11 // pred_check_branch
          %230 = sbr.rel (%p228) target = $region16
        $region15: #{dc_module_forward.1} parent=11 // pred_region
          _
        $region16: #{dc_module_forward.1} parent=11 // pred_fallthru
          _
        // Predicated region
        $region17: #{dc_module_forward.1} parent=11 // pred_check
          %p231 = pneg %p98
        $region18: #{dc_module_forward.1} parent=11 // pred_check_branch
          %233 = sbr.rel (%p231) target = $region20
        $region19: #{dc_module_forward.1} parent=11 // pred_region
          _
        $region20: #{dc_module_forward.1} parent=11 // pred_fallthru
          _
        // Predicated region
        $region21: #{dc_module_forward.1} parent=11 // pred_check
          %p234 = pneg %p119
        $region22: #{dc_module_forward.1} parent=11 // pred_check_branch
          %236 = sbr.rel (%p234) target = $region24
        $region23: #{dc_module_forward.1} parent=11 // pred_region
          _
        $region24: #{dc_module_forward.1} parent=11 // pred_fallthru
          _
        // Predicated region
        $region25: #{dc_module_forward.1} parent=11 // pred_check
          %p237 = pneg %p140
        $region26: #{dc_module_forward.1} parent=11 // pred_check_branch
          %239 = sbr.rel (%p237) target = $region28
        $region27: #{dc_module_forward.1} parent=11 // pred_region
          _
        $region28: #{dc_module_forward.1} parent=11 // pred_fallthru
          _
        // Predicated region
        $region29: #{dc_module_forward.1} parent=11 // pred_check
          %p240 = pneg %p166
        $region30: #{dc_module_forward.1} parent=11 // pred_check_branch
          %242 = sbr.rel (%p240) target = $region32
        $region31: #{dc_module_forward.1} parent=11 // pred_region
          %s243 = smul.u32 64, %s26
          %p244 = scmp.lt.s32.totalorder %s243, 63
          %s245 = scalar_select %p244, %s243, 63
          %s246 = smul.addr %s245, 4
          %s247 = scalar_lea.vmem %s5, %s246
          %s248 = smul.u32 64, %s26
        $region32: #{dc_module_forward.1} parent=11 // pred_fallthru
          _
        // Predicated region
        $region33: #{dc_module_forward.1} parent=11 // pred_check
          %p249 = pneg %p187
        $region34: #{dc_module_forward.1} parent=11 // pred_check_branch
          %251 = sbr.rel (%p249) target = $region36
        $region35: #{dc_module_forward.1} parent=11 // pred_region
          _
        $region36: #{dc_module_forward.1} parent=11 // pred_fallthru
          _
      $region12: #{dc_module_forward.1} parent=5 // pred_fallthru
        _
      %p252 = scmp.lt.s32.totalorder %s16, 2
      // Predicated region
      $region37: #{dc_module_forward.1} parent=5 // pred_check
        %p253 = pneg %p252
      $region38: #{dc_module_forward.1} parent=5 // pred_check_branch
        %255 = sbr.rel (%p253) target = $region40
      $region39: #{dc_module_forward.1} parent=5 // pred_region
        // Predicated region
        $region41: #{dc_module_forward.1} parent=39 // pred_check
          %p256 = pneg %p50
        $region42: #{dc_module_forward.1} parent=39 // pred_check_branch
          %258 = sbr.rel (%p256) target = $region44
        $region43: #{dc_module_forward.1} parent=39 // pred_region
          %s259 = smul.u32 4, %s24
          %p260 = scmp.lt.s32.totalorder %s23, 1
          %s261 = scalar_select %p260, %s23, 1
          %p262 = scmp.lt.s32.totalorder %s259, 3
          %s263 = scalar_select %p262, %s259, 3
          %s264 = smul.addr %s261, 16
          %s265 = sadd.s32 %s263, %s264
          %s266 = smul.addr %s265, 4
          %s267 = scalar_lea.vmem %s0, %s266
          %s268 = smul.u32 4, %s24
        $region44: #{dc_module_forward.1} parent=39 // pred_fallthru
          _
      $region40: #{dc_module_forward.1} parent=5 // pred_fallthru
        _
      %p269 = scmp.le.s32.totalorder 1, %s16
      %p270 = scmp.lt.s32.totalorder %s16, 3
      %p271 = pnand %p269, %p270
      %p272 = pneg %p271
      // Predicated region
      $region45: #{dc_module_forward.1} parent=5 // pred_check
        _
      $region46: #{dc_module_forward.1} parent=5 // pred_check_branch
        %274 = sbr.rel (%p271) target = $region48
      $region47: #{dc_module_forward.1} parent=5 // pred_region
        %s275 = ssub.s32 %s16, 1
        %s276 = smul.u32 4, %s26
        %p277 = scmp.lt.s32.totalorder %s25, 1
        %s278 = scalar_select %p277, %s25, 1
        %p279 = scmp.lt.s32.totalorder %s276, 3
        %s280 = scalar_select %p279, %s276, 3
        %s281 = smul.addr %s278, 16
        %s282 = sadd.s32 %s280, %s281
        %s283 = smul.addr %s282, 4
        %s284 = scalar_lea.vmem %s0, %s283
        %p285 = pneg %p56
        %p286 = pneg %p53
        %p287 = pneg %p77
        %p288 = pneg %p74
        %p289 = pneg %p98
        %p290 = pneg %p95
        %p291 = pneg %p119
        %p292 = pneg %p116
        %p293 = pneg %p140
        %p294 = pneg %p137
        %s295 = smul.u32 64, %s26
        %p296 = scmp.lt.s32.totalorder %s295, 63
        %s297 = scalar_select %p296, %s295, 63
        %s298 = smul.addr %s297, 4
        %s299 = scalar_lea.vmem %s5, %s298
        %p300 = pneg %p166
        %p301 = pneg %p163
        %p302 = pneg %p187
        %p303 = pneg %p184
        %p304 = pneg %p213
        %p305 = pneg %p210
        %s306 = sand.u32 %s200, 1
        %s307 = scalar_lea.sflag [#allocation4], %s306
        %s308 = sand.u32 %s200, 1
        %s309 = smul.addr %s308, 4
        %s310 = scalar_lea.vmem [#allocation3], %s309
        %s311 = smul.u32 4, %s26
        %p312 = scmp.lt.s32.totalorder %s25, 1
        %s313 = scalar_select %p312, %s25, 1
        %p314 = scmp.lt.s32.totalorder %s311, 3
        %s315 = scalar_select %p314, %s311, 3
        %s316 = smul.addr %s313, 16
        %s317 = sadd.s32 %s315, %s316
        %s318 = smul.addr %s317, 4
        %s319 = scalar_lea.vmem %s0, %s318
        %s320 = smul.u32 4, %s26
        %s321 = smul.u32 64, %s26
        %p322 = scmp.lt.s32.totalorder %s321, 63
        %s323 = scalar_select %p322, %s321, 63
        %s324 = smul.addr %s323, 4
        %s325 = scalar_lea.vmem %s5, %s324
        %s326 = smul.u32 64, %s26
        %p328 = scmp.eq.s32.totalorder %s26, 0
        // Predicated region
        $region49: #{dc_module_forward.1} parent=47 // pred_check
          %p329 = pneg %p328
        $region50: #{dc_module_forward.1} parent=47 // pred_check_branch
          %331 = sbr.rel (%p329) target = $region52
        $region51: #{dc_module_forward.1} parent=47 // pred_region
          %vm332 = vcmask 125952
          %333 = vst.msk [vmem:[#allocation2] sm:$0xf] %vm332, 0.0
        $region52: #{dc_module_forward.1} parent=47 // pred_fallthru
          _
        %v334 = vld [vmem:[%s319] sm:$0xff]
        %v335 = vld [vmem:[%s319 + $0x8] sm:$0xff]
        %v336 = vld [vmem:[%s319 + $0x10] sm:$0xff]
        %v337 = vld [vmem:[%s319 + $0x18] sm:$0xff]
        %v338 = vld [vmem:[%s319 + $0x20] sm:$0xff]
        %v339 = vld [vmem:[%s319 + $0x28] sm:$0xff]
        %v340 = vld [vmem:[%s319 + $0x30] sm:$0xff]
        %v341 = vld [vmem:[%s319 + $0x38] sm:$0xff]
        %v342 = vld [vmem:[%s1] sm:$0xf]
        %v343 = vld [vmem:[%s1 + $0x4] sm:$0xf]
        %v344 = vld [vmem:[%s1 + $0x8] sm:$0xf]
        %v345 = vld [vmem:[%s1 + $0xc] sm:$0xf]
        %v346 = vld [vmem:[%s2] sm:$0xff]
        %v347 = vld [vmem:[%s2 + $0x8] sm:$0xff]
        %v348 = vld [vmem:[%s2 + $0x10] sm:$0xff]
        %v349 = vld [vmem:[%s2 + $0x18] sm:$0xff]
        %351 = vset.pattern.permute.xlu0 0
        %352 = vperm.xlu0 %351, %v346
        %v353 = vpop.permute.xlu0 %352
        %356 = vset.pattern.permute.xlu0 0
        %357 = vperm.xlu0 %356, %v347
        %v358 = vpop.permute.xlu0 %357
        %361 = vset.pattern.permute.xlu0 0
        %362 = vperm.xlu0 %361, %v348
        %v363 = vpop.permute.xlu0 %362
        %366 = vset.pattern.permute.xlu0 0
        %367 = vperm.xlu0 %366, %v349
        %v368 = vpop.permute.xlu0 %367
        %v374 = vunpack.c.l.b16 %v342
        %v375 = vunpack.c.l.b16 %v343
        %v376 = vunpack.c.l.b16 %v344
        %v377 = vunpack.c.l.b16 %v345
        %v378 = vpack.c.b16 %v375, %v374
        %v379 = vpack.c.b16 %v377, %v376
        %v388 = vunpack.c.l.b16 %v334
        %v389 = vunpack.c.h.b16 %v334
        %v390 = vunpack.c.l.b16 %v335
        %v391 = vunpack.c.h.b16 %v335
        %v392 = vunpack.c.l.b16 %v336
        %v393 = vunpack.c.h.b16 %v336
        %v394 = vunpack.c.l.b16 %v337
        %v395 = vunpack.c.h.b16 %v337
        %v396 = vunpack.c.l.b16 %v338
        %v397 = vunpack.c.h.b16 %v338
        %v398 = vunpack.c.l.b16 %v339
        %v399 = vunpack.c.h.b16 %v339
        %v400 = vunpack.c.l.b16 %v340
        %v401 = vunpack.c.h.b16 %v340
        %v402 = vunpack.c.l.b16 %v341
        %v403 = vunpack.c.h.b16 %v341
        %v404 = vpack.c.b16 %v392, %v388
        %v405 = vpack.c.b16 %v393, %v389
        %v406 = vpack.c.b16 %v394, %v390
        %v407 = vpack.c.b16 %v395, %v391
        %v408 = vpack.c.b16 %v400, %v396
        %v409 = vpack.c.b16 %v401, %v397
        %v410 = vpack.c.b16 %v402, %v398
        %v411 = vpack.c.b16 %v403, %v399
        %vm420 = vcmask 261120
        %v422 = vsel %vm420, %v378, 0
        %v425 = vsel %vm420, %v379, 0
        %427 = vmatprep.subr.bf16.mxu0 %v405
        %428 = vmatpush1.bf16.msra.mxu0 %v404
        %429 = vmatprep.subr.bf16.mxu0 %v409
        %430 = vmatpush1.bf16.msra.mxu0 %v408
        %431 = vmatprep.subr.bf16.mxu0 0
        %432 = vmatpush1.bf16.msra.mxu0 0
        %433 = vmatprep.subr.bf16.mxu0 0
        %434 = vmatpush1.bf16.msra.mxu0 0
        %435 = vmatprep.subr.bf16.mxu0 0
        %436 = vmatpush1.bf16.msra.mxu0 0
        %437 = vmatprep.subr.bf16.mxu0 0
        %438 = vmatpush1.bf16.msra.mxu0 0
        %439 = vmatprep.subr.bf16.mxu0 0
        %440 = vmatpush1.bf16.msra.mxu0 0
        %441 = vmatprep.subr.bf16.mxu0 0
        %442 = vmatpush1.bf16.msra.mxu0 0
        %443 = vmatprep.subr.bf16.mxu0 0
        %444 = vmatpush1.bf16.msra.mxu0 0
        %445 = vmatprep.subr.bf16.mxu0 0
        %446 = vmatpush1.bf16.msra.mxu0 0
        %447 = vmatprep.subr.bf16.mxu0 0
        %448 = vmatpush1.bf16.msra.mxu0 0
        %449 = vmatprep.subr.bf16.mxu0 0
        %450 = vmatpush1.bf16.msra.mxu0 0
        %451 = vmatprep.subr.bf16.mxu0 0
        %452 = vmatpush1.bf16.msra.mxu0 0
        %453 = vmatprep.subr.bf16.mxu0 0
        %454 = vmatpush1.bf16.msra.mxu0 0
        %455 = vmatprep.subr.bf16.mxu0 0
        %456 = vmatpush1.bf16.msra.mxu0 0
        %457 = vmatprep.subr.bf16.mxu0 0
        %458 = vmatpush1.bf16.msra.mxu0 0
        %459 = vmatprep.mubr.bf16.mxu0 0
        %460 = vmatmul.mubr.bf16.gmra.mrb[0].mxu0 %v422
        %v461 = vpop.f32.mrb[0].mxu0
        %v462 = vadd.f32 %v353, %v461
        %v463 = vpop.f32.mrb[0].mxu0
        %v464 = vadd.f32 %v353, %v463
        %v465 = vpop.f32.mrb[0].mxu0
        %v466 = vadd.f32 %v358, %v465
        %v467 = vpop.f32.mrb[0].mxu0
        %v468 = vadd.f32 %v358, %v467
        %469 = vmatprep.mubr.bf16.mxu0 0
        %470 = vmatmul.mubr.bf16.gmra.mrb[0].mxu0 %v425
        %v471 = vpop.f32.mrb[0].mxu0
        %v472 = vadd.f32 %v363, %v471
        %v473 = vpop.f32.mrb[0].mxu0
        %v474 = vadd.f32 %v363, %v473
        %v475 = vpop.f32.mrb[0].mxu0
        %v476 = vadd.f32 %v368, %v475
        %v477 = vpop.f32.mrb[0].mxu0
        %v478 = vadd.f32 %v368, %v477
        %479 = vdwg.mxu0
        %480 = vmatprep.subr.bf16.mxu0 %v407
        %481 = vmatpush1.bf16.msra.mxu0 %v406
        %482 = vmatprep.subr.bf16.mxu0 %v411
        %483 = vmatpush1.bf16.msra.mxu0 %v410
        %484 = vmatprep.subr.bf16.mxu0 0
        %485 = vmatpush1.bf16.msra.mxu0 0
        %486 = vmatprep.subr.bf16.mxu0 0
        %487 = vmatpush1.bf16.msra.mxu0 0
        %488 = vmatprep.subr.bf16.mxu0 0
        %489 = vmatpush1.bf16.msra.mxu0 0
        %490 = vmatprep.subr.bf16.mxu0 0
        %491 = vmatpush1.bf16.msra.mxu0 0
        %492 = vmatprep.subr.bf16.mxu0 0
        %493 = vmatpush1.bf16.msra.mxu0 0
        %494 = vmatprep.subr.bf16.mxu0 0
        %495 = vmatpush1.bf16.msra.mxu0 0
        %496 = vmatprep.subr.bf16.mxu0 0
        %497 = vmatpush1.bf16.msra.mxu0 0
        %498 = vmatprep.subr.bf16.mxu0 0
        %499 = vmatpush1.bf16.msra.mxu0 0
        %500 = vmatprep.subr.bf16.mxu0 0
        %501 = vmatpush1.bf16.msra.mxu0 0
        %502 = vmatprep.subr.bf16.mxu0 0
        %503 = vmatpush1.bf16.msra.mxu0 0
        %504 = vmatprep.subr.bf16.mxu0 0
        %505 = vmatpush1.bf16.msra.mxu0 0
        %506 = vmatprep.subr.bf16.mxu0 0
        %507 = vmatpush1.bf16.msra.mxu0 0
        %508 = vmatprep.subr.bf16.mxu0 0
        %509 = vmatpush1.bf16.msra.mxu0 0
        %510 = vmatprep.subr.bf16.mxu0 0
        %511 = vmatpush1.bf16.msra.mxu0 0
        %512 = vmatprep.mubr.bf16.mxu0 0
        %513 = vmatmul.mubr.bf16.gmra.mrb[0].mxu0 %v422
        %v514 = vpop.f32.mrb[0].mxu0
        %v515 = vadd.f32 %v353, %v514
        %v516 = vpop.f32.mrb[0].mxu0
        %v517 = vadd.f32 %v353, %v516
        %v518 = vpop.f32.mrb[0].mxu0
        %v519 = vadd.f32 %v358, %v518
        %v520 = vpop.f32.mrb[0].mxu0
        %v521 = vadd.f32 %v358, %v520
        %522 = vmatprep.mubr.bf16.mxu0 0
        %523 = vmatmul.mubr.bf16.gmra.mrb[0].mxu0 %v425
        %v524 = vpop.f32.mrb[0].mxu0
        %v525 = vadd.f32 %v363, %v524
        %v526 = vpop.f32.mrb[0].mxu0
        %v527 = vadd.f32 %v363, %v526
        %v528 = vpop.f32.mrb[0].mxu0
        %v529 = vadd.f32 %v368, %v528
        %v530 = vpop.f32.mrb[0].mxu0
        %v531 = vadd.f32 %v368, %v530
        %532 = vdwg.mxu0
        %v533 = vld [vmem:[%s3] sm:$0xf]
        %v534 = vld [vmem:[%s3 + $0x4] sm:$0xf]
        %v535 = vld [vmem:[%s3 + $0x8] sm:$0xf]
        %v536 = vld [vmem:[%s3 + $0xc] sm:$0xf]
        %v537 = vpack.c.bf16 %v466, %v462
        %v538 = vpack.c.bf16 %v468, %v464
        %v539 = vpack.c.bf16 %v519, %v515
        %v540 = vpack.c.bf16 %v521, %v517
        %v541 = vpack.c.bf16 %v476, %v472
        %v542 = vpack.c.bf16 %v478, %v474
        %v543 = vpack.c.bf16 %v529, %v525
        %v544 = vpack.c.bf16 %v531, %v527
        %v545 = vld [vmem:[%s4] sm:$0xff]
        %v546 = vld [vmem:[%s4 + $0x8] sm:$0xff]
        %v547 = vld [vmem:[%s4 + $0x10] sm:$0xff]
        %v548 = vld [vmem:[%s4 + $0x18] sm:$0xff]
        %550 = vset.pattern.permute.xlu0 0
        %551 = vperm.xlu0 %550, %v545
        %v552 = vpop.permute.xlu0 %551
        %555 = vset.pattern.permute.xlu0 0
        %556 = vperm.xlu0 %555, %v546
        %v557 = vpop.permute.xlu0 %556
        %560 = vset.pattern.permute.xlu0 0
        %561 = vperm.xlu0 %560, %v547
        %v562 = vpop.permute.xlu0 %561
        %565 = vset.pattern.permute.xlu0 0
        %566 = vperm.xlu0 %565, %v548
        %v567 = vpop.permute.xlu0 %566
        %v573 = vunpack.c.l.b16 %v533
        %v574 = vunpack.c.l.b16 %v534
        %v575 = vunpack.c.l.b16 %v535
        %v576 = vunpack.c.l.b16 %v536
        %v577 = vpack.c.b16 %v574, %v573
        %v578 = vpack.c.b16 %v576, %v575
        %v580 = vsel %vm420, %v577, 0
        %v583 = vsel %vm420, %v578, 0
        %585 = vmatprep.subr.bf16.mxu0 %v538
        %586 = vmatpush1.bf16.msra.mxu0 %v537
        %587 = vmatprep.subr.bf16.mxu0 %v542
        %588 = vmatpush1.bf16.msra.mxu0 %v541
        %589 = vmatprep.subr.bf16.mxu0 0
        %590 = vmatpush1.bf16.msra.mxu0 0
        %591 = vmatprep.subr.bf16.mxu0 0
        %592 = vmatpush1.bf16.msra.mxu0 0
        %593 = vmatprep.subr.bf16.mxu0 0
        %594 = vmatpush1.bf16.msra.mxu0 0
        %595 = vmatprep.subr.bf16.mxu0 0
        %596 = vmatpush1.bf16.msra.mxu0 0
        %597 = vmatprep.subr.bf16.mxu0 0
        %598 = vmatpush1.bf16.msra.mxu0 0
        %599 = vmatprep.subr.bf16.mxu0 0
        %600 = vmatpush1.bf16.msra.mxu0 0
        %601 = vmatprep.subr.bf16.mxu0 0
        %602 = vmatpush1.bf16.msra.mxu0 0
        %603 = vmatprep.subr.bf16.mxu0 0
        %604 = vmatpush1.bf16.msra.mxu0 0
        %605 = vmatprep.subr.bf16.mxu0 0
        %606 = vmatpush1.bf16.msra.mxu0 0
        %607 = vmatprep.subr.bf16.mxu0 0
        %608 = vmatpush1.bf16.msra.mxu0 0
        %609 = vmatprep.subr.bf16.mxu0 0
        %610 = vmatpush1.bf16.msra.mxu0 0
        %611 = vmatprep.subr.bf16.mxu0 0
        %612 = vmatpush1.bf16.msra.mxu0 0
        %613 = vmatprep.subr.bf16.mxu0 0
        %614 = vmatpush1.bf16.msra.mxu0 0
        %615 = vmatprep.subr.bf16.mxu0 0
        %616 = vmatpush1.bf16.msra.mxu0 0
        %617 = vmatprep.mubr.bf16.mxu0 0
        %618 = vmatmul.mubr.bf16.gmra.mrb[0].mxu0 %v580
        %v619 = vpop.f32.mrb[0].mxu0
        %v620 = vadd.f32 %v552, %v619
        %v621 = vpop.f32.mrb[0].mxu0
        %v622 = vadd.f32 %v552, %v621
        %v623 = vpop.f32.mrb[0].mxu0
        %v624 = vadd.f32 %v557, %v623
        %v625 = vpop.f32.mrb[0].mxu0
        %v626 = vadd.f32 %v557, %v625
        %627 = vmatprep.mubr.bf16.mxu0 0
        %628 = vmatmul.mubr.bf16.gmra.mrb[0].mxu0 %v583
        %v629 = vpop.f32.mrb[0].mxu0
        %v630 = vadd.f32 %v562, %v629
        %v631 = vpop.f32.mrb[0].mxu0
        %v632 = vadd.f32 %v562, %v631
        %v633 = vpop.f32.mrb[0].mxu0
        %v634 = vadd.f32 %v567, %v633
        %v635 = vpop.f32.mrb[0].mxu0
        %v636 = vadd.f32 %v567, %v635
        %637 = vdwg.mxu0
        %638 = vmatprep.subr.bf16.mxu0 %v540
        %639 = vmatpush1.bf16.msra.mxu0 %v539
        %640 = vmatprep.subr.bf16.mxu0 %v544
        %641 = vmatpush1.bf16.msra.mxu0 %v543
        %642 = vmatprep.subr.bf16.mxu0 0
        %643 = vmatpush1.bf16.msra.mxu0 0
        %644 = vmatprep.subr.bf16.mxu0 0
        %645 = vmatpush1.bf16.msra.mxu0 0
        %646 = vmatprep.subr.bf16.mxu0 0
        %647 = vmatpush1.bf16.msra.mxu0 0
        %648 = vmatprep.subr.bf16.mxu0 0
        %649 = vmatpush1.bf16.msra.mxu0 0
        %650 = vmatprep.subr.bf16.mxu0 0
        %651 = vmatpush1.bf16.msra.mxu0 0
        %652 = vmatprep.subr.bf16.mxu0 0
        %653 = vmatpush1.bf16.msra.mxu0 0
        %654 = vmatprep.subr.bf16.mxu0 0
        %655 = vmatpush1.bf16.msra.mxu0 0
        %656 = vmatprep.subr.bf16.mxu0 0
        %657 = vmatpush1.bf16.msra.mxu0 0
        %658 = vmatprep.subr.bf16.mxu0 0
        %659 = vmatpush1.bf16.msra.mxu0 0
        %660 = vmatprep.subr.bf16.mxu0 0
        %661 = vmatpush1.bf16.msra.mxu0 0
        %662 = vmatprep.subr.bf16.mxu0 0
        %663 = vmatpush1.bf16.msra.mxu0 0
        %664 = vmatprep.subr.bf16.mxu0 0
        %665 = vmatpush1.bf16.msra.mxu0 0
        %666 = vmatprep.subr.bf16.mxu0 0
        %667 = vmatpush1.bf16.msra.mxu0 0
        %668 = vmatprep.subr.bf16.mxu0 0
        %669 = vmatpush1.bf16.msra.mxu0 0
        %670 = vmatprep.mubr.bf16.mxu0 0
        %671 = vmatmul.mubr.bf16.gmra.mrb[0].mxu0 %v580
        %v672 = vpop.f32.mrb[0].mxu0
        %v673 = vadd.f32 %v552, %v672
        %v674 = vpop.f32.mrb[0].mxu0
        %v675 = vadd.f32 %v552, %v674
        %v676 = vpop.f32.mrb[0].mxu0
        %v677 = vadd.f32 %v557, %v676
        %v678 = vpop.f32.mrb[0].mxu0
        %v679 = vadd.f32 %v557, %v678
        %680 = vmatprep.mubr.bf16.mxu0 0
        %681 = vmatmul.mubr.bf16.gmra.mrb[0].mxu0 %v583
        %v682 = vpop.f32.mrb[0].mxu0
        %v683 = vadd.f32 %v562, %v682
        %v684 = vpop.f32.mrb[0].mxu0
        %v685 = vadd.f32 %v562, %v684
        %v686 = vpop.f32.mrb[0].mxu0
        %v687 = vadd.f32 %v567, %v686
        %v688 = vpop.f32.mrb[0].mxu0
        %v689 = vadd.f32 %v567, %v688
        %690 = vdwg.mxu0
        %v691 = vmul.f32 %v620, 0.5
        %v692 = vmul.f32 %v622, 0.5
        %v693 = vmul.f32 %v673, 0.5
        %v694 = vmul.f32 %v675, 0.5
        %v695 = vmul.f32 %v624, 0.5
        %v696 = vmul.f32 %v626, 0.5
        %v697 = vmul.f32 %v677, 0.5
        %v698 = vmul.f32 %v679, 0.5
        %v699 = vmul.f32 %v630, 0.5
        %v700 = vmul.f32 %v632, 0.5
        %v701 = vmul.f32 %v683, 0.5
        %v702 = vmul.f32 %v685, 0.5
        %v703 = vmul.f32 %v634, 0.5
        %v704 = vmul.f32 %v636, 0.5
        %v705 = vmul.f32 %v687, 0.5
        %v706 = vmul.f32 %v689, 0.5
        %v707 = vmul.f32 %v620, 0.044715
        %v708 = vmul.f32 %v622, 0.044715
        %v709 = vmul.f32 %v673, 0.044715
        %v710 = vmul.f32 %v675, 0.044715
        %v711 = vmul.f32 %v624, 0.044715
        %v712 = vmul.f32 %v626, 0.044715
        %v713 = vmul.f32 %v677, 0.044715
        %v714 = vmul.f32 %v679, 0.044715
        %v715 = vmul.f32 %v630, 0.044715
        %v716 = vmul.f32 %v632, 0.044715
        %v717 = vmul.f32 %v683, 0.044715
        %v718 = vmul.f32 %v685, 0.044715
        %v719 = vmul.f32 %v634, 0.044715
        %v720 = vmul.f32 %v636, 0.044715
        %v721 = vmul.f32 %v687, 0.044715
        %v722 = vmul.f32 %v689, 0.044715
        %v723 = vmul.f32 %v707, %v620
        %v724 = vmul.f32 %v708, %v622
        %v725 = vmul.f32 %v709, %v673
        %v726 = vmul.f32 %v710, %v675
        %v727 = vmul.f32 %v711, %v624
        %v728 = vmul.f32 %v712, %v626
        %v729 = vmul.f32 %v713, %v677
        %v730 = vmul.f32 %v714, %v679
        %v731 = vmul.f32 %v715, %v630
        %v732 = vmul.f32 %v716, %v632
        %v733 = vmul.f32 %v717, %v683
        %v734 = vmul.f32 %v718, %v685
        %v735 = vmul.f32 %v719, %v634
        %v736 = vmul.f32 %v720, %v636
        %v737 = vmul.f32 %v721, %v687
        %v738 = vmul.f32 %v722, %v689
        %v739 = vmul.f32 %v723, %v620
        %v740 = vmul.f32 %v724, %v622
        %v741 = vmul.f32 %v725, %v673
        %v742 = vmul.f32 %v726, %v675
        %v743 = vmul.f32 %v727, %v624
        %v744 = vmul.f32 %v728, %v626
        %v745 = vmul.f32 %v729, %v677
        %v746 = vmul.f32 %v730, %v679
        %v747 = vmul.f32 %v731, %v630
        %v748 = vmul.f32 %v732, %v632
        %v749 = vmul.f32 %v733, %v683
        %v750 = vmul.f32 %v734, %v685
        %v751 = vmul.f32 %v735, %v634
        %v752 = vmul.f32 %v736, %v636
        %v753 = vmul.f32 %v737, %v687
        %v754 = vmul.f32 %v738, %v689
        %v755 = vadd.f32 %v620, %v739
        %v756 = vadd.f32 %v622, %v740
        %v757 = vadd.f32 %v673, %v741
        %v758 = vadd.f32 %v675, %v742
        %v759 = vadd.f32 %v624, %v743
        %v760 = vadd.f32 %v626, %v744
        %v761 = vadd.f32 %v677, %v745
        %v762 = vadd.f32 %v679, %v746
        %v763 = vadd.f32 %v630, %v747
        %v764 = vadd.f32 %v632, %v748
        %v765 = vadd.f32 %v683, %v749
        %v766 = vadd.f32 %v685, %v750
        %v767 = vadd.f32 %v634, %v751
        %v768 = vadd.f32 %v636, %v752
        %v769 = vadd.f32 %v687, %v753
        %v770 = vadd.f32 %v689, %v754
        %v771 = vmul.f32 %v755, 0.7978846
        %v772 = vmul.f32 %v756, 0.7978846
        %v773 = vmul.f32 %v757, 0.7978846
        %v774 = vmul.f32 %v758, 0.7978846
        %v775 = vmul.f32 %v759, 0.7978846
        %v776 = vmul.f32 %v760, 0.7978846
        %v777 = vmul.f32 %v761, 0.7978846
        %v778 = vmul.f32 %v762, 0.7978846
        %v779 = vmul.f32 %v763, 0.7978846
        %v780 = vmul.f32 %v764, 0.7978846
        %v781 = vmul.f32 %v765, 0.7978846
        %v782 = vmul.f32 %v766, 0.7978846
        %v783 = vmul.f32 %v767, 0.7978846
        %v784 = vmul.f32 %v768, 0.7978846
        %v785 = vmul.f32 %v769, 0.7978846
        %v786 = vmul.f32 %v770, 0.7978846
        %v787 = vtanh.pop %v771
        %v788 = vtanh.pop %v772
        %v789 = vtanh.pop %v773
        %v790 = vtanh.pop %v774
        %v791 = vtanh.pop %v775
        %v792 = vtanh.pop %v776
        %v793 = vtanh.pop %v777
        %v794 = vtanh.pop %v778
        %v795 = vtanh.pop %v779
        %v796 = vtanh.pop %v780
        %v797 = vtanh.pop %v781
        %v798 = vtanh.pop %v782
        %v799 = vtanh.pop %v783
        %v800 = vtanh.pop %v784
        %v801 = vtanh.pop %v785
        %v802 = vtanh.pop %v786
        %v803 = vadd.f32 %v787, 1.0
        %v804 = vadd.f32 %v788, 1.0
        %v805 = vadd.f32 %v789, 1.0
        %v806 = vadd.f32 %v790, 1.0
        %v807 = vadd.f32 %v791, 1.0
        %v808 = vadd.f32 %v792, 1.0
        %v809 = vadd.f32 %v793, 1.0
        %v810 = vadd.f32 %v794, 1.0
        %v811 = vadd.f32 %v795, 1.0
        %v812 = vadd.f32 %v796, 1.0
        %v813 = vadd.f32 %v797, 1.0
        %v814 = vadd.f32 %v798, 1.0
        %v815 = vadd.f32 %v799, 1.0
        %v816 = vadd.f32 %v800, 1.0
        %v817 = vadd.f32 %v801, 1.0
        %v818 = vadd.f32 %v802, 1.0
        %v819 = vmul.f32 %v691, %v803
        %v820 = vmul.f32 %v692, %v804
        %v821 = vmul.f32 %v693, %v805
        %v822 = vmul.f32 %v694, %v806
        %v823 = vmul.f32 %v695, %v807
        %v824 = vmul.f32 %v696, %v808
        %v825 = vmul.f32 %v697, %v809
        %v826 = vmul.f32 %v698, %v810
        %v827 = vmul.f32 %v699, %v811
        %v828 = vmul.f32 %v700, %v812
        %v829 = vmul.f32 %v701, %v813
        %v830 = vmul.f32 %v702, %v814
        %v831 = vmul.f32 %v703, %v815
        %v832 = vmul.f32 %v704, %v816
        %v833 = vmul.f32 %v705, %v817
        %v834 = vmul.f32 %v706, %v818
        %s835 = scalar_lea.vmem %s3, 16
        %v836 = vld [vmem:[%s835] sm:$0xf]
        %v837 = vld [vmem:[%s835 + $0x4] sm:$0xf]
        %v838 = vld [vmem:[%s835 + $0x8] sm:$0xf]
        %v839 = vld [vmem:[%s835 + $0xc] sm:$0xf]
        %v840 = vpack.c.bf16 %v823, %v819
        %v841 = vpack.c.bf16 %v824, %v820
        %v842 = vpack.c.bf16 %v825, %v821
        %v843 = vpack.c.bf16 %v826, %v822
        %v844 = vpack.c.bf16 %v831, %v827
        %v845 = vpack.c.bf16 %v832, %v828
        %v846 = vpack.c.bf16 %v833, %v829
        %v847 = vpack.c.bf16 %v834, %v830
        %s848 = scalar_lea.vmem %s4, 32
        %v849 = vld [vmem:[%s848] sm:$0xff]
        %v850 = vld [vmem:[%s848 + $0x8] sm:$0xff]
        %v851 = vld [vmem:[%s848 + $0x10] sm:$0xff]
        %v852 = vld [vmem:[%s848 + $0x18] sm:$0xff]
        %854 = vset.pattern.permute.xlu0 0
        %855 = vperm.xlu0 %854, %v849
        %v856 = vpop.permute.xlu0 %855
        %859 = vset.pattern.permute.xlu0 0
        %860 = vperm.xlu0 %859, %v850
        %v861 = vpop.permute.xlu0 %860
        %864 = vset.pattern.permute.xlu0 0
        %865 = vperm.xlu0 %864, %v851
        %v866 = vpop.permute.xlu0 %865
        %869 = vset.pattern.permute.xlu0 0
        %870 = vperm.xlu0 %869, %v852
        %v871 = vpop.permute.xlu0 %870
        %v877 = vunpack.c.l.b16 %v836
        %v878 = vunpack.c.l.b16 %v837
        %v879 = vunpack.c.l.b16 %v838
        %v880 = vunpack.c.l.b16 %v839
        %v881 = vpack.c.b16 %v878, %v877
        %v882 = vpack.c.b16 %v880, %v879
        %v884 = vsel %vm420, %v881, 0
        %v887 = vsel %vm420, %v882, 0
        %889 = vmatprep.subr.bf16.mxu0 %v841
        %890 = vmatpush1.bf16.msra.mxu0 %v840
        %891 = vmatprep.subr.bf16.mxu0 %v845
        %892 = vmatpush1.bf16.msra.mxu0 %v844
        %893 = vmatprep.subr.bf16.mxu0 0
        %894 = vmatpush1.bf16.msra.mxu0 0
        %895 = vmatprep.subr.bf16.mxu0 0
        %896 = vmatpush1.bf16.msra.mxu0 0
        %897 = vmatprep.subr.bf16.mxu0 0
        %898 = vmatpush1.bf16.msra.mxu0 0
        %899 = vmatprep.subr.bf16.mxu0 0
        %900 = vmatpush1.bf16.msra.mxu0 0
        %901 = vmatprep.subr.bf16.mxu0 0
        %902 = vmatpush1.bf16.msra.mxu0 0
        %903 = vmatprep.subr.bf16.mxu0 0
        %904 = vmatpush1.bf16.msra.mxu0 0
        %905 = vmatprep.subr.bf16.mxu0 0
        %906 = vmatpush1.bf16.msra.mxu0 0
        %907 = vmatprep.subr.bf16.mxu0 0
        %908 = vmatpush1.bf16.msra.mxu0 0
        %909 = vmatprep.subr.bf16.mxu0 0
        %910 = vmatpush1.bf16.msra.mxu0 0
        %911 = vmatprep.subr.bf16.mxu0 0
        %912 = vmatpush1.bf16.msra.mxu0 0
        %913 = vmatprep.subr.bf16.mxu0 0
        %914 = vmatpush1.bf16.msra.mxu0 0
        %915 = vmatprep.subr.bf16.mxu0 0
        %916 = vmatpush1.bf16.msra.mxu0 0
        %917 = vmatprep.subr.bf16.mxu0 0
        %918 = vmatpush1.bf16.msra.mxu0 0
        %919 = vmatprep.subr.bf16.mxu0 0
        %920 = vmatpush1.bf16.msra.mxu0 0
        %921 = vmatprep.mubr.bf16.mxu0 0
        %922 = vmatmul.mubr.bf16.gmra.mrb[0].mxu0 %v884
        %v923 = vpop.f32.mrb[0].mxu0
        %v924 = vadd.f32 %v856, %v923
        %v925 = vpop.f32.mrb[0].mxu0
        %v926 = vadd.f32 %v856, %v925
        %v927 = vpop.f32.mrb[0].mxu0
        %v928 = vadd.f32 %v861, %v927
        %v929 = vpop.f32.mrb[0].mxu0
        %v930 = vadd.f32 %v861, %v929
        %931 = vmatprep.mubr.bf16.mxu0 0
        %932 = vmatmul.mubr.bf16.gmra.mrb[0].mxu0 %v887
        %v933 = vpop.f32.mrb[0].mxu0
        %v934 = vadd.f32 %v866, %v933
        %v935 = vpop.f32.mrb[0].mxu0
        %v936 = vadd.f32 %v866, %v935
        %v937 = vpop.f32.mrb[0].mxu0
        %v938 = vadd.f32 %v871, %v937
        %v939 = vpop.f32.mrb[0].mxu0
        %v940 = vadd.f32 %v871, %v939
        %941 = vdwg.mxu0
        %942 = vmatprep.subr.bf16.mxu0 %v843
        %943 = vmatpush1.bf16.msra.mxu0 %v842
        %944 = vmatprep.subr.bf16.mxu0 %v847
        %945 = vmatpush1.bf16.msra.mxu0 %v846
        %946 = vmatprep.subr.bf16.mxu0 0
        %947 = vmatpush1.bf16.msra.mxu0 0
        %948 = vmatprep.subr.bf16.mxu0 0
        %949 = vmatpush1.bf16.msra.mxu0 0
        %950 = vmatprep.subr.bf16.mxu0 0
        %951 = vmatpush1.bf16.msra.mxu0 0
        %952 = vmatprep.subr.bf16.mxu0 0
        %953 = vmatpush1.bf16.msra.mxu0 0
        %954 = vmatprep.subr.bf16.mxu0 0
        %955 = vmatpush1.bf16.msra.mxu0 0
        %956 = vmatprep.subr.bf16.mxu0 0
        %957 = vmatpush1.bf16.msra.mxu0 0
        %958 = vmatprep.subr.bf16.mxu0 0
        %959 = vmatpush1.bf16.msra.mxu0 0
        %960 = vmatprep.subr.bf16.mxu0 0
        %961 = vmatpush1.bf16.msra.mxu0 0
        %962 = vmatprep.subr.bf16.mxu0 0
        %963 = vmatpush1.bf16.msra.mxu0 0
        %964 = vmatprep.subr.bf16.mxu0 0
        %965 = vmatpush1.bf16.msra.mxu0 0
        %966 = vmatprep.subr.bf16.mxu0 0
        %967 = vmatpush1.bf16.msra.mxu0 0
        %968 = vmatprep.subr.bf16.mxu0 0
        %969 = vmatpush1.bf16.msra.mxu0 0
        %970 = vmatprep.subr.bf16.mxu0 0
        %971 = vmatpush1.bf16.msra.mxu0 0
        %972 = vmatprep.subr.bf16.mxu0 0
        %973 = vmatpush1.bf16.msra.mxu0 0
        %974 = vmatprep.mubr.bf16.mxu0 0
        %975 = vmatmul.mubr.bf16.gmra.mrb[0].mxu0 %v884
        %v976 = vpop.f32.mrb[0].mxu0
        %v977 = vadd.f32 %v856, %v976
        %v978 = vpop.f32.mrb[0].mxu0
        %v979 = vadd.f32 %v856, %v978
        %v980 = vpop.f32.mrb[0].mxu0
        %v981 = vadd.f32 %v861, %v980
        %v982 = vpop.f32.mrb[0].mxu0
        %v983 = vadd.f32 %v861, %v982
        %984 = vmatprep.mubr.bf16.mxu0 0
        %985 = vmatmul.mubr.bf16.gmra.mrb[0].mxu0 %v887
        %v986 = vpop.f32.mrb[0].mxu0
        %v987 = vadd.f32 %v866, %v986
        %v988 = vpop.f32.mrb[0].mxu0
        %v989 = vadd.f32 %v866, %v988
        %v990 = vpop.f32.mrb[0].mxu0
        %v991 = vadd.f32 %v871, %v990
        %v992 = vpop.f32.mrb[0].mxu0
        %v993 = vadd.f32 %v871, %v992
        %994 = vdwg.mxu0
        %v995 = vmul.f32 %v924, 0.5
        %v996 = vmul.f32 %v926, 0.5
        %v997 = vmul.f32 %v977, 0.5
        %v998 = vmul.f32 %v979, 0.5
        %v999 = vmul.f32 %v928, 0.5
        %v1000 = vmul.f32 %v930, 0.5
        %v1001 = vmul.f32 %v981, 0.5
        %v1002 = vmul.f32 %v983, 0.5
        %v1003 = vmul.f32 %v934, 0.5
        %v1004 = vmul.f32 %v936, 0.5
        %v1005 = vmul.f32 %v987, 0.5
        %v1006 = vmul.f32 %v989, 0.5
        %v1007 = vmul.f32 %v938, 0.5
        %v1008 = vmul.f32 %v940, 0.5
        %v1009 = vmul.f32 %v991, 0.5
        %v1010 = vmul.f32 %v993, 0.5
        %v1011 = vmul.f32 %v924, 0.044715
        %v1012 = vmul.f32 %v926, 0.044715
        %v1013 = vmul.f32 %v977, 0.044715
        %v1014 = vmul.f32 %v979, 0.044715
        %v1015 = vmul.f32 %v928, 0.044715
        %v1016 = vmul.f32 %v930, 0.044715
        %v1017 = vmul.f32 %v981, 0.044715
        %v1018 = vmul.f32 %v983, 0.044715
        %v1019 = vmul.f32 %v934, 0.044715
        %v1020 = vmul.f32 %v936, 0.044715
        %v1021 = vmul.f32 %v987, 0.044715
        %v1022 = vmul.f32 %v989, 0.044715
        %v1023 = vmul.f32 %v938, 0.044715
        %v1024 = vmul.f32 %v940, 0.044715
        %v1025 = vmul.f32 %v991, 0.044715
        %v1026 = vmul.f32 %v993, 0.044715
        %v1027 = vmul.f32 %v1011, %v924
        %v1028 = vmul.f32 %v1012, %v926
        %v1029 = vmul.f32 %v1013, %v977
        %v1030 = vmul.f32 %v1014, %v979
        %v1031 = vmul.f32 %v1015, %v928
        %v1032 = vmul.f32 %v1016, %v930
        %v1033 = vmul.f32 %v1017, %v981
        %v1034 = vmul.f32 %v1018, %v983
        %v1035 = vmul.f32 %v1019, %v934
        %v1036 = vmul.f32 %v1020, %v936
        %v1037 = vmul.f32 %v1021, %v987
        %v1038 = vmul.f32 %v1022, %v989
        %v1039 = vmul.f32 %v1023, %v938
        %v1040 = vmul.f32 %v1024, %v940
        %v1041 = vmul.f32 %v1025, %v991
        %v1042 = vmul.f32 %v1026, %v993
        %v1043 = vmul.f32 %v1027, %v924
        %v1044 = vmul.f32 %v1028, %v926
        %v1045 = vmul.f32 %v1029, %v977
        %v1046 = vmul.f32 %v1030, %v979
        %v1047 = vmul.f32 %v1031, %v928
        %v1048 = vmul.f32 %v1032, %v930
        %v1049 = vmul.f32 %v1033, %v981
        %v1050 = vmul.f32 %v1034, %v983
        %v1051 = vmul.f32 %v1035, %v934
        %v1052 = vmul.f32 %v1036, %v936
        %v1053 = vmul.f32 %v1037, %v987
        %v1054 = vmul.f32 %v1038, %v989
        %v1055 = vmul.f32 %v1039, %v938
        %v1056 = vmul.f32 %v1040, %v940
        %v1057 = vmul.f32 %v1041, %v991
        %v1058 = vmul.f32 %v1042, %v993
        %v1059 = vadd.f32 %v924, %v1043
        %v1060 = vadd.f32 %v926, %v1044
        %v1061 = vadd.f32 %v977, %v1045
        %v1062 = vadd.f32 %v979, %v1046
        %v1063 = vadd.f32 %v928, %v1047
        %v1064 = vadd.f32 %v930, %v1048
        %v1065 = vadd.f32 %v981, %v1049
        %v1066 = vadd.f32 %v983, %v1050
        %v1067 = vadd.f32 %v934, %v1051
        %v1068 = vadd.f32 %v936, %v1052
        %v1069 = vadd.f32 %v987, %v1053
        %v1070 = vadd.f32 %v989, %v1054
        %v1071 = vadd.f32 %v938, %v1055
        %v1072 = vadd.f32 %v940, %v1056
        %v1073 = vadd.f32 %v991, %v1057
        %v1074 = vadd.f32 %v993, %v1058
        %v1075 = vmul.f32 %v1059, 0.7978846
        %v1076 = vmul.f32 %v1060, 0.7978846
        %v1077 = vmul.f32 %v1061, 0.7978846
        %v1078 = vmul.f32 %v1062, 0.7978846
        %v1079 = vmul.f32 %v1063, 0.7978846
        %v1080 = vmul.f32 %v1064, 0.7978846
        %v1081 = vmul.f32 %v1065, 0.7978846
        %v1082 = vmul.f32 %v1066, 0.7978846
        %v1083 = vmul.f32 %v1067, 0.7978846
        %v1084 = vmul.f32 %v1068, 0.7978846
        %v1085 = vmul.f32 %v1069, 0.7978846
        %v1086 = vmul.f32 %v1070, 0.7978846
        %v1087 = vmul.f32 %v1071, 0.7978846
        %v1088 = vmul.f32 %v1072, 0.7978846
        %v1089 = vmul.f32 %v1073, 0.7978846
        %v1090 = vmul.f32 %v1074, 0.7978846
        %v1091 = vtanh.pop %v1075
        %v1092 = vtanh.pop %v1076
        %v1093 = vtanh.pop %v1077
        %v1094 = vtanh.pop %v1078
        %v1095 = vtanh.pop %v1079
        %v1096 = vtanh.pop %v1080
        %v1097 = vtanh.pop %v1081
        %v1098 = vtanh.pop %v1082
        %v1099 = vtanh.pop %v1083
        %v1100 = vtanh.pop %v1084
        %v1101 = vtanh.pop %v1085
        %v1102 = vtanh.pop %v1086
        %v1103 = vtanh.pop %v1087
        %v1104 = vtanh.pop %v1088
        %v1105 = vtanh.pop %v1089
        %v1106 = vtanh.pop %v1090
        %v1107 = vadd.f32 %v1091, 1.0
        %v1108 = vadd.f32 %v1092, 1.0
        %v1109 = vadd.f32 %v1093, 1.0
        %v1110 = vadd.f32 %v1094, 1.0
        %v1111 = vadd.f32 %v1095, 1.0
        %v1112 = vadd.f32 %v1096, 1.0
        %v1113 = vadd.f32 %v1097, 1.0
        %v1114 = vadd.f32 %v1098, 1.0
        %v1115 = vadd.f32 %v1099, 1.0
        %v1116 = vadd.f32 %v1100, 1.0
        %v1117 = vadd.f32 %v1101, 1.0
        %v1118 = vadd.f32 %v1102, 1.0
        %v1119 = vadd.f32 %v1103, 1.0
        %v1120 = vadd.f32 %v1104, 1.0
        %v1121 = vadd.f32 %v1105, 1.0
        %v1122 = vadd.f32 %v1106, 1.0
        %v1123 = vmul.f32 %v995, %v1107
        %v1124 = vmul.f32 %v996, %v1108
        %v1125 = vmul.f32 %v997, %v1109
        %v1126 = vmul.f32 %v998, %v1110
        %v1127 = vmul.f32 %v999, %v1111
        %v1128 = vmul.f32 %v1000, %v1112
        %v1129 = vmul.f32 %v1001, %v1113
        %v1130 = vmul.f32 %v1002, %v1114
        %v1131 = vmul.f32 %v1003, %v1115
        %v1132 = vmul.f32 %v1004, %v1116
        %v1133 = vmul.f32 %v1005, %v1117
        %v1134 = vmul.f32 %v1006, %v1118
        %v1135 = vmul.f32 %v1007, %v1119
        %v1136 = vmul.f32 %v1008, %v1120
        %v1137 = vmul.f32 %v1009, %v1121
        %v1138 = vmul.f32 %v1010, %v1122
        %s1139 = scalar_lea.vmem %s3, 32
        %v1140 = vld [vmem:[%s1139] sm:$0xf]
        %v1141 = vld [vmem:[%s1139 + $0x4] sm:$0xf]
        %v1142 = vld [vmem:[%s1139 + $0x8] sm:$0xf]
        %v1143 = vld [vmem:[%s1139 + $0xc] sm:$0xf]
        %v1144 = vpack.c.bf16 %v1127, %v1123
        %v1145 = vpack.c.bf16 %v1128, %v1124
        %v1146 = vpack.c.bf16 %v1129, %v1125
        %v1147 = vpack.c.bf16 %v1130, %v1126
        %v1148 = vpack.c.bf16 %v1135, %v1131
        %v1149 = vpack.c.bf16 %v1136, %v1132
        %v1150 = vpack.c.bf16 %v1137, %v1133
        %v1151 = vpack.c.bf16 %v1138, %v1134
        %s1152 = scalar_lea.vmem %s4, 64
        %v1153 = vld [vmem:[%s1152] sm:$0xff]
        %v1154 = vld [vmem:[%s1152 + $0x8] sm:$0xff]
        %v1155 = vld [vmem:[%s1152 + $0x10] sm:$0xff]
        %v1156 = vld [vmem:[%s1152 + $0x18] sm:$0xff]
        %1158 = vset.pattern.permute.xlu0 0
        %1159 = vperm.xlu0 %1158, %v1153
        %v1160 = vpop.permute.xlu0 %1159
        %1163 = vset.pattern.permute.xlu0 0
        %1164 = vperm.xlu0 %1163, %v1154
        %v1165 = vpop.permute.xlu0 %1164
        %1168 = vset.pattern.permute.xlu0 0
        %1169 = vperm.xlu0 %1168, %v1155
        %v1170 = vpop.permute.xlu0 %1169
        %1173 = vset.pattern.permute.xlu0 0
        %1174 = vperm.xlu0 %1173, %v1156
        %v1175 = vpop.permute.xlu0 %1174
        %v1181 = vunpack.c.l.b16 %v1140
        %v1182 = vunpack.c.l.b16 %v1141
        %v1183 = vunpack.c.l.b16 %v1142
        %v1184 = vunpack.c.l.b16 %v1143
        %v1185 = vpack.c.b16 %v1182, %v1181
        %v1186 = vpack.c.b16 %v1184, %v1183
        %v1188 = vsel %vm420, %v1185, 0
        %v1191 = vsel %vm420, %v1186, 0
        %1193 = vmatprep.subr.bf16.mxu0 %v1145
        %1194 = vmatpush1.bf16.msra.mxu0 %v1144
        %1195 = vmatprep.subr.bf16.mxu0 %v1149
        %1196 = vmatpush1.bf16.msra.mxu0 %v1148
        %1197 = vmatprep.subr.bf16.mxu0 0
        %1198 = vmatpush1.bf16.msra.mxu0 0
        %1199 = vmatprep.subr.bf16.mxu0 0
        %1200 = vmatpush1.bf16.msra.mxu0 0
        %1201 = vmatprep.subr.bf16.mxu0 0
        %1202 = vmatpush1.bf16.msra.mxu0 0
        %1203 = vmatprep.subr.bf16.mxu0 0
        %1204 = vmatpush1.bf16.msra.mxu0 0
        %1205 = vmatprep.subr.bf16.mxu0 0
        %1206 = vmatpush1.bf16.msra.mxu0 0
        %1207 = vmatprep.subr.bf16.mxu0 0
        %1208 = vmatpush1.bf16.msra.mxu0 0
        %1209 = vmatprep.subr.bf16.mxu0 0
        %1210 = vmatpush1.bf16.msra.mxu0 0
        %1211 = vmatprep.subr.bf16.mxu0 0
        %1212 = vmatpush1.bf16.msra.mxu0 0
        %1213 = vmatprep.subr.bf16.mxu0 0
        %1214 = vmatpush1.bf16.msra.mxu0 0
        %1215 = vmatprep.subr.bf16.mxu0 0
        %1216 = vmatpush1.bf16.msra.mxu0 0
        %1217 = vmatprep.subr.bf16.mxu0 0
        %1218 = vmatpush1.bf16.msra.mxu0 0
        %1219 = vmatprep.subr.bf16.mxu0 0
        %1220 = vmatpush1.bf16.msra.mxu0 0
        %1221 = vmatprep.subr.bf16.mxu0 0
        %1222 = vmatpush1.bf16.msra.mxu0 0
        %1223 = vmatprep.subr.bf16.mxu0 0
        %1224 = vmatpush1.bf16.msra.mxu0 0
        %1225 = vmatprep.mubr.bf16.mxu0 0
        %1226 = vmatmul.mubr.bf16.gmra.mrb[0].mxu0 %v1188
        %v1227 = vpop.f32.mrb[0].mxu0
        %v1228 = vadd.f32 %v1160, %v1227
        %v1229 = vpop.f32.mrb[0].mxu0
        %v1230 = vadd.f32 %v1160, %v1229
        %v1231 = vpop.f32.mrb[0].mxu0
        %v1232 = vadd.f32 %v1165, %v1231
        %v1233 = vpop.f32.mrb[0].mxu0
        %v1234 = vadd.f32 %v1165, %v1233
        %1235 = vmatprep.mubr.bf16.mxu0 0
        %1236 = vmatmul.mubr.bf16.gmra.mrb[0].mxu0 %v1191
        %v1237 = vpop.f32.mrb[0].mxu0
        %v1238 = vadd.f32 %v1170, %v1237
        %v1239 = vpop.f32.mrb[0].mxu0
        %v1240 = vadd.f32 %v1170, %v1239
        %v1241 = vpop.f32.mrb[0].mxu0
        %v1242 = vadd.f32 %v1175, %v1241
        %v1243 = vpop.f32.mrb[0].mxu0
        %v1244 = vadd.f32 %v1175, %v1243
        %1245 = vdwg.mxu0
        %1246 = vmatprep.subr.bf16.mxu0 %v1147
        %1247 = vmatpush1.bf16.msra.mxu0 %v1146
        %1248 = vmatprep.subr.bf16.mxu0 %v1151
        %1249 = vmatpush1.bf16.msra.mxu0 %v1150
        %1250 = vmatprep.subr.bf16.mxu0 0
        %1251 = vmatpush1.bf16.msra.mxu0 0
        %1252 = vmatprep.subr.bf16.mxu0 0
        %1253 = vmatpush1.bf16.msra.mxu0 0
        %1254 = vmatprep.subr.bf16.mxu0 0
        %1255 = vmatpush1.bf16.msra.mxu0 0
        %1256 = vmatprep.subr.bf16.mxu0 0
        %1257 = vmatpush1.bf16.msra.mxu0 0
        %1258 = vmatprep.subr.bf16.mxu0 0
        %1259 = vmatpush1.bf16.msra.mxu0 0
        %1260 = vmatprep.subr.bf16.mxu0 0
        %1261 = vmatpush1.bf16.msra.mxu0 0
        %1262 = vmatprep.subr.bf16.mxu0 0
        %1263 = vmatpush1.bf16.msra.mxu0 0
        %1264 = vmatprep.subr.bf16.mxu0 0
        %1265 = vmatpush1.bf16.msra.mxu0 0
        %1266 = vmatprep.subr.bf16.mxu0 0
        %1267 = vmatpush1.bf16.msra.mxu0 0
        %1268 = vmatprep.subr.bf16.mxu0 0
        %1269 = vmatpush1.bf16.msra.mxu0 0
        %1270 = vmatprep.subr.bf16.mxu0 0
        %1271 = vmatpush1.bf16.msra.mxu0 0
        %1272 = vmatprep.subr.bf16.mxu0 0
        %1273 = vmatpush1.bf16.msra.mxu0 0
        %1274 = vmatprep.subr.bf16.mxu0 0
        %1275 = vmatpush1.bf16.msra.mxu0 0
        %1276 = vmatprep.subr.bf16.mxu0 0
        %1277 = vmatpush1.bf16.msra.mxu0 0
        %1278 = vmatprep.mubr.bf16.mxu0 0
        %1279 = vmatmul.mubr.bf16.gmra.mrb[0].mxu0 %v1188
        %v1280 = vpop.f32.mrb[0].mxu0
        %v1281 = vadd.f32 %v1160, %v1280
        %v1282 = vpop.f32.mrb[0].mxu0
        %v1283 = vadd.f32 %v1160, %v1282
        %v1284 = vpop.f32.mrb[0].mxu0
        %v1285 = vadd.f32 %v1165, %v1284
        %v1286 = vpop.f32.mrb[0].mxu0
        %v1287 = vadd.f32 %v1165, %v1286
        %1288 = vmatprep.mubr.bf16.mxu0 0
        %1289 = vmatmul.mubr.bf16.gmra.mrb[0].mxu0 %v1191
        %v1290 = vpop.f32.mrb[0].mxu0
        %v1291 = vadd.f32 %v1170, %v1290
        %v1292 = vpop.f32.mrb[0].mxu0
        %v1293 = vadd.f32 %v1170, %v1292
        %v1294 = vpop.f32.mrb[0].mxu0
        %v1295 = vadd.f32 %v1175, %v1294
        %v1296 = vpop.f32.mrb[0].mxu0
        %v1297 = vadd.f32 %v1175, %v1296
        %1298 = vdwg.mxu0
        %v1299 = vadd.f32 %v1228, %v462
        %v1300 = vadd.f32 %v1230, %v464
        %v1301 = vadd.f32 %v1281, %v515
        %v1302 = vadd.f32 %v1283, %v517
        %v1303 = vadd.f32 %v1232, %v466
        %v1304 = vadd.f32 %v1234, %v468
        %v1305 = vadd.f32 %v1285, %v519
        %v1306 = vadd.f32 %v1287, %v521
        %v1307 = vadd.f32 %v1238, %v472
        %v1308 = vadd.f32 %v1240, %v474
        %v1309 = vadd.f32 %v1291, %v525
        %v1310 = vadd.f32 %v1293, %v527
        %v1311 = vadd.f32 %v1242, %v476
        %v1312 = vadd.f32 %v1244, %v478
        %v1313 = vadd.f32 %v1295, %v529
        %v1314 = vadd.f32 %v1297, %v531
        %s1315 = scalar_lea.vmem %s3, 48
        %v1316 = vld [vmem:[%s1315] sm:$0xf]
        %v1317 = vld [vmem:[%s1315 + $0x4] sm:$0xf]
        %v1318 = vld [vmem:[%s1315 + $0x8] sm:$0xf]
        %v1319 = vld [vmem:[%s1315 + $0xc] sm:$0xf]
        %v1320 = vpack.c.bf16 %v1303, %v1299
        %v1321 = vpack.c.bf16 %v1304, %v1300
        %v1322 = vpack.c.bf16 %v1305, %v1301
        %v1323 = vpack.c.bf16 %v1306, %v1302
        %v1324 = vpack.c.bf16 %v1311, %v1307
        %v1325 = vpack.c.bf16 %v1312, %v1308
        %v1326 = vpack.c.bf16 %v1313, %v1309
        %v1327 = vpack.c.bf16 %v1314, %v1310
        %s1328 = scalar_lea.vmem %s4, 96
        %v1329 = vld [vmem:[%s1328] sm:$0xff]
        %v1330 = vld [vmem:[%s1328 + $0x8] sm:$0xff]
        %v1331 = vld [vmem:[%s1328 + $0x10] sm:$0xff]
        %v1332 = vld [vmem:[%s1328 + $0x18] sm:$0xff]
        %1334 = vset.pattern.permute.xlu0 0
        %1335 = vperm.xlu0 %1334, %v1329
        %v1336 = vpop.permute.xlu0 %1335
        %1339 = vset.pattern.permute.xlu0 0
        %1340 = vperm.xlu0 %1339, %v1330
        %v1341 = vpop.permute.xlu0 %1340
        %1344 = vset.pattern.permute.xlu0 0
        %1345 = vperm.xlu0 %1344, %v1331
        %v1346 = vpop.permute.xlu0 %1345
        %1349 = vset.pattern.permute.xlu0 0
        %1350 = vperm.xlu0 %1349, %v1332
        %v1351 = vpop.permute.xlu0 %1350
        %v1357 = vunpack.c.l.b16 %v1316
        %v1358 = vunpack.c.l.b16 %v1317
        %v1359 = vunpack.c.l.b16 %v1318
        %v1360 = vunpack.c.l.b16 %v1319
        %v1361 = vpack.c.b16 %v1358, %v1357
        %v1362 = vpack.c.b16 %v1360, %v1359
        %v1364 = vsel %vm420, %v1361, 0
        %v1367 = vsel %vm420, %v1362, 0
        %1369 = vmatprep.subr.bf16.mxu0 %v1321
        %1370 = vmatpush1.bf16.msra.mxu0 %v1320
        %1371 = vmatprep.subr.bf16.mxu0 %v1325
        %1372 = vmatpush1.bf16.msra.mxu0 %v1324
        %1373 = vmatprep.subr.bf16.mxu0 0
        %1374 = vmatpush1.bf16.msra.mxu0 0
        %1375 = vmatprep.subr.bf16.mxu0 0
        %1376 = vmatpush1.bf16.msra.mxu0 0
        %1377 = vmatprep.subr.bf16.mxu0 0
        %1378 = vmatpush1.bf16.msra.mxu0 0
        %1379 = vmatprep.subr.bf16.mxu0 0
        %1380 = vmatpush1.bf16.msra.mxu0 0
        %1381 = vmatprep.subr.bf16.mxu0 0
        %1382 = vmatpush1.bf16.msra.mxu0 0
        %1383 = vmatprep.subr.bf16.mxu0 0
        %1384 = vmatpush1.bf16.msra.mxu0 0
        %1385 = vmatprep.subr.bf16.mxu0 0
        %1386 = vmatpush1.bf16.msra.mxu0 0
        %1387 = vmatprep.subr.bf16.mxu0 0
        %1388 = vmatpush1.bf16.msra.mxu0 0
        %1389 = vmatprep.subr.bf16.mxu0 0
        %1390 = vmatpush1.bf16.msra.mxu0 0
        %1391 = vmatprep.subr.bf16.mxu0 0
        %1392 = vmatpush1.bf16.msra.mxu0 0
        %1393 = vmatprep.subr.bf16.mxu0 0
        %1394 = vmatpush1.bf16.msra.mxu0 0
        %1395 = vmatprep.subr.bf16.mxu0 0
        %1396 = vmatpush1.bf16.msra.mxu0 0
        %1397 = vmatprep.subr.bf16.mxu0 0
        %1398 = vmatpush1.bf16.msra.mxu0 0
        %1399 = vmatprep.subr.bf16.mxu0 0
        %1400 = vmatpush1.bf16.msra.mxu0 0
        %1401 = vmatprep.mubr.bf16.mxu0 0
        %1402 = vmatmul.mubr.bf16.gmra.mrb[0].mxu0 %v1364
        %v1403 = vpop.f32.mrb[0].mxu0
        %v1404 = vadd.f32 %v1336, %v1403
        %v1405 = vpop.f32.mrb[0].mxu0
        %v1406 = vadd.f32 %v1336, %v1405
        %v1407 = vpop.f32.mrb[0].mxu0
        %v1408 = vadd.f32 %v1341, %v1407
        %v1409 = vpop.f32.mrb[0].mxu0
        %v1410 = vadd.f32 %v1341, %v1409
        %1411 = vmatprep.mubr.bf16.mxu0 0
        %1412 = vmatmul.mubr.bf16.gmra.mrb[0].mxu0 %v1367
        %v1413 = vpop.f32.mrb[0].mxu0
        %v1414 = vadd.f32 %v1346, %v1413
        %v1415 = vpop.f32.mrb[0].mxu0
        %v1416 = vadd.f32 %v1346, %v1415
        %v1417 = vpop.f32.mrb[0].mxu0
        %v1418 = vadd.f32 %v1351, %v1417
        %v1419 = vpop.f32.mrb[0].mxu0
        %v1420 = vadd.f32 %v1351, %v1419
        %1421 = vdwg.mxu0
        %1422 = vmatprep.subr.bf16.mxu0 %v1323
        %1423 = vmatpush1.bf16.msra.mxu0 %v1322
        %1424 = vmatprep.subr.bf16.mxu0 %v1327
        %1425 = vmatpush1.bf16.msra.mxu0 %v1326
        %1426 = vmatprep.subr.bf16.mxu0 0
        %1427 = vmatpush1.bf16.msra.mxu0 0
        %1428 = vmatprep.subr.bf16.mxu0 0
        %1429 = vmatpush1.bf16.msra.mxu0 0
        %1430 = vmatprep.subr.bf16.mxu0 0
        %1431 = vmatpush1.bf16.msra.mxu0 0
        %1432 = vmatprep.subr.bf16.mxu0 0
        %1433 = vmatpush1.bf16.msra.mxu0 0
        %1434 = vmatprep.subr.bf16.mxu0 0
        %1435 = vmatpush1.bf16.msra.mxu0 0
        %1436 = vmatprep.subr.bf16.mxu0 0
        %1437 = vmatpush1.bf16.msra.mxu0 0
        %1438 = vmatprep.subr.bf16.mxu0 0
        %1439 = vmatpush1.bf16.msra.mxu0 0
        %1440 = vmatprep.subr.bf16.mxu0 0
        %1441 = vmatpush1.bf16.msra.mxu0 0
        %1442 = vmatprep.subr.bf16.mxu0 0
        %1443 = vmatpush1.bf16.msra.mxu0 0
        %1444 = vmatprep.subr.bf16.mxu0 0
        %1445 = vmatpush1.bf16.msra.mxu0 0
        %1446 = vmatprep.subr.bf16.mxu0 0
        %1447 = vmatpush1.bf16.msra.mxu0 0
        %1448 = vmatprep.subr.bf16.mxu0 0
        %1449 = vmatpush1.bf16.msra.mxu0 0
        %1450 = vmatprep.subr.bf16.mxu0 0
        %1451 = vmatpush1.bf16.msra.mxu0 0
        %1452 = vmatprep.subr.bf16.mxu0 0
        %1453 = vmatpush1.bf16.msra.mxu0 0
        %1454 = vmatprep.mubr.bf16.mxu0 0
        %1455 = vmatmul.mubr.bf16.gmra.mrb[0].mxu0 %v1364
        %v1456 = vpop.f32.mrb[0].mxu0
        %v1457 = vadd.f32 %v1336, %v1456
        %v1458 = vpop.f32.mrb[0].mxu0
        %v1459 = vadd.f32 %v1336, %v1458
        %v1460 = vpop.f32.mrb[0].mxu0
        %v1461 = vadd.f32 %v1341, %v1460
        %v1462 = vpop.f32.mrb[0].mxu0
        %v1463 = vadd.f32 %v1341, %v1462
        %1464 = vmatprep.mubr.bf16.mxu0 0
        %1465 = vmatmul.mubr.bf16.gmra.mrb[0].mxu0 %v1367
        %v1466 = vpop.f32.mrb[0].mxu0
        %v1467 = vadd.f32 %v1346, %v1466
        %v1468 = vpop.f32.mrb[0].mxu0
        %v1469 = vadd.f32 %v1346, %v1468
        %v1470 = vpop.f32.mrb[0].mxu0
        %v1471 = vadd.f32 %v1351, %v1470
        %v1472 = vpop.f32.mrb[0].mxu0
        %v1473 = vadd.f32 %v1351, %v1472
        %1474 = vdwg.mxu0
        %v1475 = vmul.f32 %v1404, 0.5
        %v1476 = vmul.f32 %v1406, 0.5
        %v1477 = vmul.f32 %v1457, 0.5
        %v1478 = vmul.f32 %v1459, 0.5
        %v1479 = vmul.f32 %v1408, 0.5
        %v1480 = vmul.f32 %v1410, 0.5
        %v1481 = vmul.f32 %v1461, 0.5
        %v1482 = vmul.f32 %v1463, 0.5
        %v1483 = vmul.f32 %v1414, 0.5
        %v1484 = vmul.f32 %v1416, 0.5
        %v1485 = vmul.f32 %v1467, 0.5
        %v1486 = vmul.f32 %v1469, 0.5
        %v1487 = vmul.f32 %v1418, 0.5
        %v1488 = vmul.f32 %v1420, 0.5
        %v1489 = vmul.f32 %v1471, 0.5
        %v1490 = vmul.f32 %v1473, 0.5
        %v1491 = vmul.f32 %v1404, 0.044715
        %v1492 = vmul.f32 %v1406, 0.044715
        %v1493 = vmul.f32 %v1457, 0.044715
        %v1494 = vmul.f32 %v1459, 0.044715
        %v1495 = vmul.f32 %v1408, 0.044715
        %v1496 = vmul.f32 %v1410, 0.044715
        %v1497 = vmul.f32 %v1461, 0.044715
        %v1498 = vmul.f32 %v1463, 0.044715
        %v1499 = vmul.f32 %v1414, 0.044715
        %v1500 = vmul.f32 %v1416, 0.044715
        %v1501 = vmul.f32 %v1467, 0.044715
        %v1502 = vmul.f32 %v1469, 0.044715
        %v1503 = vmul.f32 %v1418, 0.044715
        %v1504 = vmul.f32 %v1420, 0.044715
        %v1505 = vmul.f32 %v1471, 0.044715
        %v1506 = vmul.f32 %v1473, 0.044715
        %v1507 = vmul.f32 %v1491, %v1404
        %v1508 = vmul.f32 %v1492, %v1406
        %v1509 = vmul.f32 %v1493, %v1457
        %v1510 = vmul.f32 %v1494, %v1459
        %v1511 = vmul.f32 %v1495, %v1408
        %v1512 = vmul.f32 %v1496, %v1410
        %v1513 = vmul.f32 %v1497, %v1461
        %v1514 = vmul.f32 %v1498, %v1463
        %v1515 = vmul.f32 %v1499, %v1414
        %v1516 = vmul.f32 %v1500, %v1416
        %v1517 = vmul.f32 %v1501, %v1467
        %v1518 = vmul.f32 %v1502, %v1469
        %v1519 = vmul.f32 %v1503, %v1418
        %v1520 = vmul.f32 %v1504, %v1420
        %v1521 = vmul.f32 %v1505, %v1471
        %v1522 = vmul.f32 %v1506, %v1473
        %v1523 = vmul.f32 %v1507, %v1404
        %v1524 = vmul.f32 %v1508, %v1406
        %v1525 = vmul.f32 %v1509, %v1457
        %v1526 = vmul.f32 %v1510, %v1459
        %v1527 = vmul.f32 %v1511, %v1408
        %v1528 = vmul.f32 %v1512, %v1410
        %v1529 = vmul.f32 %v1513, %v1461
        %v1530 = vmul.f32 %v1514, %v1463
        %v1531 = vmul.f32 %v1515, %v1414
        %v1532 = vmul.f32 %v1516, %v1416
        %v1533 = vmul.f32 %v1517, %v1467
        %v1534 = vmul.f32 %v1518, %v1469
        %v1535 = vmul.f32 %v1519, %v1418
        %v1536 = vmul.f32 %v1520, %v1420
        %v1537 = vmul.f32 %v1521, %v1471
        %v1538 = vmul.f32 %v1522, %v1473
        %v1539 = vadd.f32 %v1404, %v1523
        %v1540 = vadd.f32 %v1406, %v1524
        %v1541 = vadd.f32 %v1457, %v1525
        %v1542 = vadd.f32 %v1459, %v1526
        %v1543 = vadd.f32 %v1408, %v1527
        %v1544 = vadd.f32 %v1410, %v1528
        %v1545 = vadd.f32 %v1461, %v1529
        %v1546 = vadd.f32 %v1463, %v1530
        %v1547 = vadd.f32 %v1414, %v1531
        %v1548 = vadd.f32 %v1416, %v1532
        %v1549 = vadd.f32 %v1467, %v1533
        %v1550 = vadd.f32 %v1469, %v1534
        %v1551 = vadd.f32 %v1418, %v1535
        %v1552 = vadd.f32 %v1420, %v1536
        %v1553 = vadd.f32 %v1471, %v1537
        %v1554 = vadd.f32 %v1473, %v1538
        %v1555 = vmul.f32 %v1539, 0.7978846
        %v1556 = vmul.f32 %v1540, 0.7978846
        %v1557 = vmul.f32 %v1541, 0.7978846
        %v1558 = vmul.f32 %v1542, 0.7978846
        %v1559 = vmul.f32 %v1543, 0.7978846
        %v1560 = vmul.f32 %v1544, 0.7978846
        %v1561 = vmul.f32 %v1545, 0.7978846
        %v1562 = vmul.f32 %v1546, 0.7978846
        %v1563 = vmul.f32 %v1547, 0.7978846
        %v1564 = vmul.f32 %v1548, 0.7978846
        %v1565 = vmul.f32 %v1549, 0.7978846
        %v1566 = vmul.f32 %v1550, 0.7978846
        %v1567 = vmul.f32 %v1551, 0.7978846
        %v1568 = vmul.f32 %v1552, 0.7978846
        %v1569 = vmul.f32 %v1553, 0.7978846
        %v1570 = vmul.f32 %v1554, 0.7978846
        %v1571 = vtanh.pop %v1555
        %v1572 = vtanh.pop %v1556
        %v1573 = vtanh.pop %v1557
        %v1574 = vtanh.pop %v1558
        %v1575 = vtanh.pop %v1559
        %v1576 = vtanh.pop %v1560
        %v1577 = vtanh.pop %v1561
        %v1578 = vtanh.pop %v1562
        %v1579 = vtanh.pop %v1563
        %v1580 = vtanh.pop %v1564
        %v1581 = vtanh.pop %v1565
        %v1582 = vtanh.pop %v1566
        %v1583 = vtanh.pop %v1567
        %v1584 = vtanh.pop %v1568
        %v1585 = vtanh.pop %v1569
        %v1586 = vtanh.pop %v1570
        %v1587 = vadd.f32 %v1571, 1.0
        %v1588 = vadd.f32 %v1572, 1.0
        %v1589 = vadd.f32 %v1573, 1.0
        %v1590 = vadd.f32 %v1574, 1.0
        %v1591 = vadd.f32 %v1575, 1.0
        %v1592 = vadd.f32 %v1576, 1.0
        %v1593 = vadd.f32 %v1577, 1.0
        %v1594 = vadd.f32 %v1578, 1.0
        %v1595 = vadd.f32 %v1579, 1.0
        %v1596 = vadd.f32 %v1580, 1.0
        %v1597 = vadd.f32 %v1581, 1.0
        %v1598 = vadd.f32 %v1582, 1.0
        %v1599 = vadd.f32 %v1583, 1.0
        %v1600 = vadd.f32 %v1584, 1.0
        %v1601 = vadd.f32 %v1585, 1.0
        %v1602 = vadd.f32 %v1586, 1.0
        %v1603 = vmul.f32 %v1475, %v1587
        %v1604 = vmul.f32 %v1476, %v1588
        %v1605 = vmul.f32 %v1477, %v1589
        %v1606 = vmul.f32 %v1478, %v1590
        %v1607 = vmul.f32 %v1479, %v1591
        %v1608 = vmul.f32 %v1480, %v1592
        %v1609 = vmul.f32 %v1481, %v1593
        %v1610 = vmul.f32 %v1482, %v1594
        %v1611 = vmul.f32 %v1483, %v1595
        %v1612 = vmul.f32 %v1484, %v1596
        %v1613 = vmul.f32 %v1485, %v1597
        %v1614 = vmul.f32 %v1486, %v1598
        %v1615 = vmul.f32 %v1487, %v1599
        %v1616 = vmul.f32 %v1488, %v1600
        %v1617 = vmul.f32 %v1489, %v1601
        %v1618 = vmul.f32 %v1490, %v1602
        %s1619 = scalar_lea.vmem %s3, 64
        %v1620 = vld [vmem:[%s1619] sm:$0xf]
        %v1621 = vld [vmem:[%s1619 + $0x4] sm:$0xf]
        %v1622 = vld [vmem:[%s1619 + $0x8] sm:$0xf]
        %v1623 = vld [vmem:[%s1619 + $0xc] sm:$0xf]
        %v1624 = vpack.c.bf16 %v1607, %v1603
        %v1625 = vpack.c.bf16 %v1608, %v1604
        %v1626 = vpack.c.bf16 %v1609, %v1605
        %v1627 = vpack.c.bf16 %v1610, %v1606
        %v1628 = vpack.c.bf16 %v1615, %v1611
        %v1629 = vpack.c.bf16 %v1616, %v1612
        %v1630 = vpack.c.bf16 %v1617, %v1613
        %v1631 = vpack.c.bf16 %v1618, %v1614
        %s1632 = scalar_lea.vmem %s4, 128
        %v1633 = vld [vmem:[%s1632] sm:$0xff]
        %v1634 = vld [vmem:[%s1632 + $0x8] sm:$0xff]
        %v1635 = vld [vmem:[%s1632 + $0x10] sm:$0xff]
        %v1636 = vld [vmem:[%s1632 + $0x18] sm:$0xff]
        %1638 = vset.pattern.permute.xlu0 0
        %1639 = vperm.xlu0 %1638, %v1633
        %v1640 = vpop.permute.xlu0 %1639
        %1643 = vset.pattern.permute.xlu0 0
        %1644 = vperm.xlu0 %1643, %v1634
        %v1645 = vpop.permute.xlu0 %1644
        %1648 = vset.pattern.permute.xlu0 0
        %1649 = vperm.xlu0 %1648, %v1635
        %v1650 = vpop.permute.xlu0 %1649
        %1653 = vset.pattern.permute.xlu0 0
        %1654 = vperm.xlu0 %1653, %v1636
        %v1655 = vpop.permute.xlu0 %1654
        %v1661 = vunpack.c.l.b16 %v1620
        %v1662 = vunpack.c.l.b16 %v1621
        %v1663 = vunpack.c.l.b16 %v1622
        %v1664 = vunpack.c.l.b16 %v1623
        %v1665 = vpack.c.b16 %v1662, %v1661
        %v1666 = vpack.c.b16 %v1664, %v1663
        %v1668 = vsel %vm420, %v1665, 0
        %v1671 = vsel %vm420, %v1666, 0
        %1673 = vmatprep.subr.bf16.mxu0 %v1625
        %1674 = vmatpush1.bf16.msra.mxu0 %v1624
        %1675 = vmatprep.subr.bf16.mxu0 %v1629
        %1676 = vmatpush1.bf16.msra.mxu0 %v1628
        %1677 = vmatprep.subr.bf16.mxu0 0
        %1678 = vmatpush1.bf16.msra.mxu0 0
        %1679 = vmatprep.subr.bf16.mxu0 0
        %1680 = vmatpush1.bf16.msra.mxu0 0
        %1681 = vmatprep.subr.bf16.mxu0 0
        %1682 = vmatpush1.bf16.msra.mxu0 0
        %1683 = vmatprep.subr.bf16.mxu0 0
        %1684 = vmatpush1.bf16.msra.mxu0 0
        %1685 = vmatprep.subr.bf16.mxu0 0
        %1686 = vmatpush1.bf16.msra.mxu0 0
        %1687 = vmatprep.subr.bf16.mxu0 0
        %1688 = vmatpush1.bf16.msra.mxu0 0
        %1689 = vmatprep.subr.bf16.mxu0 0
        %1690 = vmatpush1.bf16.msra.mxu0 0
        %1691 = vmatprep.subr.bf16.mxu0 0
        %1692 = vmatpush1.bf16.msra.mxu0 0
        %1693 = vmatprep.subr.bf16.mxu0 0
        %1694 = vmatpush1.bf16.msra.mxu0 0
        %1695 = vmatprep.subr.bf16.mxu0 0
        %1696 = vmatpush1.bf16.msra.mxu0 0
        %1697 = vmatprep.subr.bf16.mxu0 0
        %1698 = vmatpush1.bf16.msra.mxu0 0
        %1699 = vmatprep.subr.bf16.mxu0 0
        %1700 = vmatpush1.bf16.msra.mxu0 0
        %1701 = vmatprep.subr.bf16.mxu0 0
        %1702 = vmatpush1.bf16.msra.mxu0 0
        %1703 = vmatprep.subr.bf16.mxu0 0
        %1704 = vmatpush1.bf16.msra.mxu0 0
        %1705 = vmatprep.mubr.bf16.mxu0 0
        %1706 = vmatmul.mubr.bf16.gmra.mrb[0].mxu0 %v1668
        %v1707 = vpop.f32.mrb[0].mxu0
        %v1708 = vadd.f32 %v1640, %v1707
        %v1709 = vpop.f32.mrb[0].mxu0
        %v1710 = vadd.f32 %v1640, %v1709
        %v1711 = vpop.f32.mrb[0].mxu0
        %v1712 = vadd.f32 %v1645, %v1711
        %v1713 = vpop.f32.mrb[0].mxu0
        %v1714 = vadd.f32 %v1645, %v1713
        %1715 = vmatprep.mubr.bf16.mxu0 0
        %1716 = vmatmul.mubr.bf16.gmra.mrb[0].mxu0 %v1671
        %v1717 = vpop.f32.mrb[0].mxu0
        %v1718 = vadd.f32 %v1650, %v1717
        %v1719 = vpop.f32.mrb[0].mxu0
        %v1720 = vadd.f32 %v1650, %v1719
        %v1721 = vpop.f32.mrb[0].mxu0
        %v1722 = vadd.f32 %v1655, %v1721
        %v1723 = vpop.f32.mrb[0].mxu0
        %v1724 = vadd.f32 %v1655, %v1723
        %1725 = vdwg.mxu0
        %1726 = vmatprep.subr.bf16.mxu0 %v1627
        %1727 = vmatpush1.bf16.msra.mxu0 %v1626
        %1728 = vmatprep.subr.bf16.mxu0 %v1631
        %1729 = vmatpush1.bf16.msra.mxu0 %v1630
        %1730 = vmatprep.subr.bf16.mxu0 0
        %1731 = vmatpush1.bf16.msra.mxu0 0
        %1732 = vmatprep.subr.bf16.mxu0 0
        %1733 = vmatpush1.bf16.msra.mxu0 0
        %1734 = vmatprep.subr.bf16.mxu0 0
        %1735 = vmatpush1.bf16.msra.mxu0 0
        %1736 = vmatprep.subr.bf16.mxu0 0
        %1737 = vmatpush1.bf16.msra.mxu0 0
        %1738 = vmatprep.subr.bf16.mxu0 0
        %1739 = vmatpush1.bf16.msra.mxu0 0
        %1740 = vmatprep.subr.bf16.mxu0 0
        %1741 = vmatpush1.bf16.msra.mxu0 0
        %1742 = vmatprep.subr.bf16.mxu0 0
        %1743 = vmatpush1.bf16.msra.mxu0 0
        %1744 = vmatprep.subr.bf16.mxu0 0
        %1745 = vmatpush1.bf16.msra.mxu0 0
        %1746 = vmatprep.subr.bf16.mxu0 0
        %1747 = vmatpush1.bf16.msra.mxu0 0
        %1748 = vmatprep.subr.bf16.mxu0 0
        %1749 = vmatpush1.bf16.msra.mxu0 0
        %1750 = vmatprep.subr.bf16.mxu0 0
        %1751 = vmatpush1.bf16.msra.mxu0 0
        %1752 = vmatprep.subr.bf16.mxu0 0
        %1753 = vmatpush1.bf16.msra.mxu0 0
        %1754 = vmatprep.subr.bf16.mxu0 0
        %1755 = vmatpush1.bf16.msra.mxu0 0
        %1756 = vmatprep.subr.bf16.mxu0 0
        %1757 = vmatpush1.bf16.msra.mxu0 0
        %1758 = vmatprep.mubr.bf16.mxu0 0
        %1759 = vmatmul.mubr.bf16.gmra.mrb[0].mxu0 %v1668
        %v1760 = vpop.f32.mrb[0].mxu0
        %v1761 = vadd.f32 %v1640, %v1760
        %v1762 = vpop.f32.mrb[0].mxu0
        %v1763 = vadd.f32 %v1640, %v1762
        %v1764 = vpop.f32.mrb[0].mxu0
        %v1765 = vadd.f32 %v1645, %v1764
        %v1766 = vpop.f32.mrb[0].mxu0
        %v1767 = vadd.f32 %v1645, %v1766
        %1768 = vmatprep.mubr.bf16.mxu0 0
        %1769 = vmatmul.mubr.bf16.gmra.mrb[0].mxu0 %v1671
        %v1770 = vpop.f32.mrb[0].mxu0
        %v1771 = vadd.f32 %v1650, %v1770
        %v1772 = vpop.f32.mrb[0].mxu0
        %v1773 = vadd.f32 %v1650, %v1772
        %v1774 = vpop.f32.mrb[0].mxu0
        %v1775 = vadd.f32 %v1655, %v1774
        %v1776 = vpop.f32.mrb[0].mxu0
        %v1777 = vadd.f32 %v1655, %v1776
        %1778 = vdwg.mxu0
        %v1779 = vmul.f32 %v1708, 0.5
        %v1780 = vmul.f32 %v1710, 0.5
        %v1781 = vmul.f32 %v1761, 0.5
        %v1782 = vmul.f32 %v1763, 0.5
        %v1783 = vmul.f32 %v1712, 0.5
        %v1784 = vmul.f32 %v1714, 0.5
        %v1785 = vmul.f32 %v1765, 0.5
        %v1786 = vmul.f32 %v1767, 0.5
        %v1787 = vmul.f32 %v1718, 0.5
        %v1788 = vmul.f32 %v1720, 0.5
        %v1789 = vmul.f32 %v1771, 0.5
        %v1790 = vmul.f32 %v1773, 0.5
        %v1791 = vmul.f32 %v1722, 0.5
        %v1792 = vmul.f32 %v1724, 0.5
        %v1793 = vmul.f32 %v1775, 0.5
        %v1794 = vmul.f32 %v1777, 0.5
        %v1795 = vmul.f32 %v1708, 0.044715
        %v1796 = vmul.f32 %v1710, 0.044715
        %v1797 = vmul.f32 %v1761, 0.044715
        %v1798 = vmul.f32 %v1763, 0.044715
        %v1799 = vmul.f32 %v1712, 0.044715
        %v1800 = vmul.f32 %v1714, 0.044715
        %v1801 = vmul.f32 %v1765, 0.044715
        %v1802 = vmul.f32 %v1767, 0.044715
        %v1803 = vmul.f32 %v1718, 0.044715
        %v1804 = vmul.f32 %v1720, 0.044715
        %v1805 = vmul.f32 %v1771, 0.044715
        %v1806 = vmul.f32 %v1773, 0.044715
        %v1807 = vmul.f32 %v1722, 0.044715
        %v1808 = vmul.f32 %v1724, 0.044715
        %v1809 = vmul.f32 %v1775, 0.044715
        %v1810 = vmul.f32 %v1777, 0.044715
        %v1811 = vmul.f32 %v1795, %v1708
        %v1812 = vmul.f32 %v1796, %v1710
        %v1813 = vmul.f32 %v1797, %v1761
        %v1814 = vmul.f32 %v1798, %v1763
        %v1815 = vmul.f32 %v1799, %v1712
        %v1816 = vmul.f32 %v1800, %v1714
        %v1817 = vmul.f32 %v1801, %v1765
        %v1818 = vmul.f32 %v1802, %v1767
        %v1819 = vmul.f32 %v1803, %v1718
        %v1820 = vmul.f32 %v1804, %v1720
        %v1821 = vmul.f32 %v1805, %v1771
        %v1822 = vmul.f32 %v1806, %v1773
        %v1823 = vmul.f32 %v1807, %v1722
        %v1824 = vmul.f32 %v1808, %v1724
        %v1825 = vmul.f32 %v1809, %v1775
        %v1826 = vmul.f32 %v1810, %v1777
        %v1827 = vmul.f32 %v1811, %v1708
        %v1828 = vmul.f32 %v1812, %v1710
        %v1829 = vmul.f32 %v1813, %v1761
        %v1830 = vmul.f32 %v1814, %v1763
        %v1831 = vmul.f32 %v1815, %v1712
        %v1832 = vmul.f32 %v1816, %v1714
        %v1833 = vmul.f32 %v1817, %v1765
        %v1834 = vmul.f32 %v1818, %v1767
        %v1835 = vmul.f32 %v1819, %v1718
        %v1836 = vmul.f32 %v1820, %v1720
        %v1837 = vmul.f32 %v1821, %v1771
        %v1838 = vmul.f32 %v1822, %v1773
        %v1839 = vmul.f32 %v1823, %v1722
        %v1840 = vmul.f32 %v1824, %v1724
        %v1841 = vmul.f32 %v1825, %v1775
        %v1842 = vmul.f32 %v1826, %v1777
        %v1843 = vadd.f32 %v1708, %v1827
        %v1844 = vadd.f32 %v1710, %v1828
        %v1845 = vadd.f32 %v1761, %v1829
        %v1846 = vadd.f32 %v1763, %v1830
        %v1847 = vadd.f32 %v1712, %v1831
        %v1848 = vadd.f32 %v1714, %v1832
        %v1849 = vadd.f32 %v1765, %v1833
        %v1850 = vadd.f32 %v1767, %v1834
        %v1851 = vadd.f32 %v1718, %v1835
        %v1852 = vadd.f32 %v1720, %v1836
        %v1853 = vadd.f32 %v1771, %v1837
        %v1854 = vadd.f32 %v1773, %v1838
        %v1855 = vadd.f32 %v1722, %v1839
        %v1856 = vadd.f32 %v1724, %v1840
        %v1857 = vadd.f32 %v1775, %v1841
        %v1858 = vadd.f32 %v1777, %v1842
        %v1859 = vmul.f32 %v1843, 0.7978846
        %v1860 = vmul.f32 %v1844, 0.7978846
        %v1861 = vmul.f32 %v1845, 0.7978846
        %v1862 = vmul.f32 %v1846, 0.7978846
        %v1863 = vmul.f32 %v1847, 0.7978846
        %v1864 = vmul.f32 %v1848, 0.7978846
        %v1865 = vmul.f32 %v1849, 0.7978846
        %v1866 = vmul.f32 %v1850, 0.7978846
        %v1867 = vmul.f32 %v1851, 0.7978846
        %v1868 = vmul.f32 %v1852, 0.7978846
        %v1869 = vmul.f32 %v1853, 0.7978846
        %v1870 = vmul.f32 %v1854, 0.7978846
        %v1871 = vmul.f32 %v1855, 0.7978846
        %v1872 = vmul.f32 %v1856, 0.7978846
        %v1873 = vmul.f32 %v1857, 0.7978846
        %v1874 = vmul.f32 %v1858, 0.7978846
        %v1875 = vtanh.pop %v1859
        %v1876 = vtanh.pop %v1860
        %v1877 = vtanh.pop %v1861
        %v1878 = vtanh.pop %v1862
        %v1879 = vtanh.pop %v1863
        %v1880 = vtanh.pop %v1864
        %v1881 = vtanh.pop %v1865
        %v1882 = vtanh.pop %v1866
        %v1883 = vtanh.pop %v1867
        %v1884 = vtanh.pop %v1868
        %v1885 = vtanh.pop %v1869
        %v1886 = vtanh.pop %v1870
        %v1887 = vtanh.pop %v1871
        %v1888 = vtanh.pop %v1872
        %v1889 = vtanh.pop %v1873
        %v1890 = vtanh.pop %v1874
        %v1891 = vadd.f32 %v1875, 1.0
        %v1892 = vadd.f32 %v1876, 1.0
        %v1893 = vadd.f32 %v1877, 1.0
        %v1894 = vadd.f32 %v1878, 1.0
        %v1895 = vadd.f32 %v1879, 1.0
        %v1896 = vadd.f32 %v1880, 1.0
        %v1897 = vadd.f32 %v1881, 1.0
        %v1898 = vadd.f32 %v1882, 1.0
        %v1899 = vadd.f32 %v1883, 1.0
        %v1900 = vadd.f32 %v1884, 1.0
        %v1901 = vadd.f32 %v1885, 1.0
        %v1902 = vadd.f32 %v1886, 1.0
        %v1903 = vadd.f32 %v1887, 1.0
        %v1904 = vadd.f32 %v1888, 1.0
        %v1905 = vadd.f32 %v1889, 1.0
        %v1906 = vadd.f32 %v1890, 1.0
        %v1907 = vmul.f32 %v1779, %v1891
        %v1908 = vmul.f32 %v1780, %v1892
        %v1909 = vmul.f32 %v1781, %v1893
        %v1910 = vmul.f32 %v1782, %v1894
        %v1911 = vmul.f32 %v1783, %v1895
        %v1912 = vmul.f32 %v1784, %v1896
        %v1913 = vmul.f32 %v1785, %v1897
        %v1914 = vmul.f32 %v1786, %v1898
        %v1915 = vmul.f32 %v1787, %v1899
        %v1916 = vmul.f32 %v1788, %v1900
        %v1917 = vmul.f32 %v1789, %v1901
        %v1918 = vmul.f32 %v1790, %v1902
        %v1919 = vmul.f32 %v1791, %v1903
        %v1920 = vmul.f32 %v1792, %v1904
        %v1921 = vmul.f32 %v1793, %v1905
        %v1922 = vmul.f32 %v1794, %v1906
        %s1923 = scalar_lea.vmem %s3, 80
        %v1924 = vld [vmem:[%s1923] sm:$0xf]
        %v1925 = vld [vmem:[%s1923 + $0x4] sm:$0xf]
        %v1926 = vld [vmem:[%s1923 + $0x8] sm:$0xf]
        %v1927 = vld [vmem:[%s1923 + $0xc] sm:$0xf]
        %v1928 = vpack.c.bf16 %v1911, %v1907
        %v1929 = vpack.c.bf16 %v1912, %v1908
        %v1930 = vpack.c.bf16 %v1913, %v1909
        %v1931 = vpack.c.bf16 %v1914, %v1910
        %v1932 = vpack.c.bf16 %v1919, %v1915
        %v1933 = vpack.c.bf16 %v1920, %v1916
        %v1934 = vpack.c.bf16 %v1921, %v1917
        %v1935 = vpack.c.bf16 %v1922, %v1918
        %s1936 = scalar_lea.vmem %s4, 160
        %v1937 = vld [vmem:[%s1936] sm:$0xff]
        %v1938 = vld [vmem:[%s1936 + $0x8] sm:$0xff]
        %v1939 = vld [vmem:[%s1936 + $0x10] sm:$0xff]
        %v1940 = vld [vmem:[%s1936 + $0x18] sm:$0xff]
        %1942 = vset.pattern.permute.xlu0 0
        %1943 = vperm.xlu0 %1942, %v1937
        %v1944 = vpop.permute.xlu0 %1943
        %1947 = vset.pattern.permute.xlu0 0
        %1948 = vperm.xlu0 %1947, %v1938
        %v1949 = vpop.permute.xlu0 %1948
        %1952 = vset.pattern.permute.xlu0 0
        %1953 = vperm.xlu0 %1952, %v1939
        %v1954 = vpop.permute.xlu0 %1953
        %1957 = vset.pattern.permute.xlu0 0
        %1958 = vperm.xlu0 %1957, %v1940
        %v1959 = vpop.permute.xlu0 %1958
        %v1965 = vunpack.c.l.b16 %v1924
        %v1966 = vunpack.c.l.b16 %v1925
        %v1967 = vunpack.c.l.b16 %v1926
        %v1968 = vunpack.c.l.b16 %v1927
        %v1969 = vpack.c.b16 %v1966, %v1965
        %v1970 = vpack.c.b16 %v1968, %v1967
        %v1972 = vsel %vm420, %v1969, 0
        %v1975 = vsel %vm420, %v1970, 0
        %1977 = vmatprep.subr.bf16.mxu0 %v1929
        %1978 = vmatpush1.bf16.msra.mxu0 %v1928
        %1979 = vmatprep.subr.bf16.mxu0 %v1933
        %1980 = vmatpush1.bf16.msra.mxu0 %v1932
        %1981 = vmatprep.subr.bf16.mxu0 0
        %1982 = vmatpush1.bf16.msra.mxu0 0
        %1983 = vmatprep.subr.bf16.mxu0 0
        %1984 = vmatpush1.bf16.msra.mxu0 0
        %1985 = vmatprep.subr.bf16.mxu0 0
        %1986 = vmatpush1.bf16.msra.mxu0 0
        %1987 = vmatprep.subr.bf16.mxu0 0
        %1988 = vmatpush1.bf16.msra.mxu0 0
        %1989 = vmatprep.subr.bf16.mxu0 0
        %1990 = vmatpush1.bf16.msra.mxu0 0
        %1991 = vmatprep.subr.bf16.mxu0 0
        %1992 = vmatpush1.bf16.msra.mxu0 0
        %1993 = vmatprep.subr.bf16.mxu0 0
        %1994 = vmatpush1.bf16.msra.mxu0 0
        %1995 = vmatprep.subr.bf16.mxu0 0
        %1996 = vmatpush1.bf16.msra.mxu0 0
        %1997 = vmatprep.subr.bf16.mxu0 0
        %1998 = vmatpush1.bf16.msra.mxu0 0
        %1999 = vmatprep.subr.bf16.mxu0 0
        %2000 = vmatpush1.bf16.msra.mxu0 0
        %2001 = vmatprep.subr.bf16.mxu0 0
        %2002 = vmatpush1.bf16.msra.mxu0 0
        %2003 = vmatprep.subr.bf16.mxu0 0
        %2004 = vmatpush1.bf16.msra.mxu0 0
        %2005 = vmatprep.subr.bf16.mxu0 0
        %2006 = vmatpush1.bf16.msra.mxu0 0
        %2007 = vmatprep.subr.bf16.mxu0 0
        %2008 = vmatpush1.bf16.msra.mxu0 0
        %2009 = vmatprep.mubr.bf16.mxu0 0
        %2010 = vmatmul.mubr.bf16.gmra.mrb[0].mxu0 %v1972
        %v2011 = vpop.f32.mrb[0].mxu0
        %v2012 = vadd.f32 %v1944, %v2011
        %v2013 = vpop.f32.mrb[0].mxu0
        %v2014 = vadd.f32 %v1944, %v2013
        %v2015 = vpop.f32.mrb[0].mxu0
        %v2016 = vadd.f32 %v1949, %v2015
        %v2017 = vpop.f32.mrb[0].mxu0
        %v2018 = vadd.f32 %v1949, %v2017
        %2019 = vmatprep.mubr.bf16.mxu0 0
        %2020 = vmatmul.mubr.bf16.gmra.mrb[0].mxu0 %v1975
        %v2021 = vpop.f32.mrb[0].mxu0
        %v2022 = vadd.f32 %v1954, %v2021
        %v2023 = vpop.f32.mrb[0].mxu0
        %v2024 = vadd.f32 %v1954, %v2023
        %v2025 = vpop.f32.mrb[0].mxu0
        %v2026 = vadd.f32 %v1959, %v2025
        %v2027 = vpop.f32.mrb[0].mxu0
        %v2028 = vadd.f32 %v1959, %v2027
        %2029 = vdwg.mxu0
        %2030 = vmatprep.subr.bf16.mxu0 %v1931
        %2031 = vmatpush1.bf16.msra.mxu0 %v1930
        %2032 = vmatprep.subr.bf16.mxu0 %v1935
        %2033 = vmatpush1.bf16.msra.mxu0 %v1934
        %2034 = vmatprep.subr.bf16.mxu0 0
        %2035 = vmatpush1.bf16.msra.mxu0 0
        %2036 = vmatprep.subr.bf16.mxu0 0
        %2037 = vmatpush1.bf16.msra.mxu0 0
        %2038 = vmatprep.subr.bf16.mxu0 0
        %2039 = vmatpush1.bf16.msra.mxu0 0
        %2040 = vmatprep.subr.bf16.mxu0 0
        %2041 = vmatpush1.bf16.msra.mxu0 0
        %2042 = vmatprep.subr.bf16.mxu0 0
        %2043 = vmatpush1.bf16.msra.mxu0 0
        %2044 = vmatprep.subr.bf16.mxu0 0
        %2045 = vmatpush1.bf16.msra.mxu0 0
        %2046 = vmatprep.subr.bf16.mxu0 0
        %2047 = vmatpush1.bf16.msra.mxu0 0
        %2048 = vmatprep.subr.bf16.mxu0 0
        %2049 = vmatpush1.bf16.msra.mxu0 0
        %2050 = vmatprep.subr.bf16.mxu0 0
        %2051 = vmatpush1.bf16.msra.mxu0 0
        %2052 = vmatprep.subr.bf16.mxu0 0
        %2053 = vmatpush1.bf16.msra.mxu0 0
        %2054 = vmatprep.subr.bf16.mxu0 0
        %2055 = vmatpush1.bf16.msra.mxu0 0
        %2056 = vmatprep.subr.bf16.mxu0 0
        %2057 = vmatpush1.bf16.msra.mxu0 0
        %2058 = vmatprep.subr.bf16.mxu0 0
        %2059 = vmatpush1.bf16.msra.mxu0 0
        %2060 = vmatprep.subr.bf16.mxu0 0
        %2061 = vmatpush1.bf16.msra.mxu0 0
        %2062 = vmatprep.mubr.bf16.mxu0 0
        %2063 = vmatmul.mubr.bf16.gmra.mrb[0].mxu0 %v1972
        %v2064 = vpop.f32.mrb[0].mxu0
        %v2065 = vadd.f32 %v1944, %v2064
        %v2066 = vpop.f32.mrb[0].mxu0
        %v2067 = vadd.f32 %v1944, %v2066
        %v2068 = vpop.f32.mrb[0].mxu0
        %v2069 = vadd.f32 %v1949, %v2068
        %v2070 = vpop.f32.mrb[0].mxu0
        %v2071 = vadd.f32 %v1949, %v2070
        %2072 = vmatprep.mubr.bf16.mxu0 0
        %2073 = vmatmul.mubr.bf16.gmra.mrb[0].mxu0 %v1975
        %v2074 = vpop.f32.mrb[0].mxu0
        %v2075 = vadd.f32 %v1954, %v2074
        %v2076 = vpop.f32.mrb[0].mxu0
        %v2077 = vadd.f32 %v1954, %v2076
        %v2078 = vpop.f32.mrb[0].mxu0
        %v2079 = vadd.f32 %v1959, %v2078
        %v2080 = vpop.f32.mrb[0].mxu0
        %v2081 = vadd.f32 %v1959, %v2080
        %2082 = vdwg.mxu0
        %v2083 = vadd.f32 %v2012, %v1299
        %v2084 = vadd.f32 %v2014, %v1300
        %v2085 = vadd.f32 %v2065, %v1301
        %v2086 = vadd.f32 %v2067, %v1302
        %v2087 = vadd.f32 %v2016, %v1303
        %v2088 = vadd.f32 %v2018, %v1304
        %v2089 = vadd.f32 %v2069, %v1305
        %v2090 = vadd.f32 %v2071, %v1306
        %v2091 = vadd.f32 %v2022, %v1307
        %v2092 = vadd.f32 %v2024, %v1308
        %v2093 = vadd.f32 %v2075, %v1309
        %v2094 = vadd.f32 %v2077, %v1310
        %v2095 = vadd.f32 %v2026, %v1311
        %v2096 = vadd.f32 %v2028, %v1312
        %v2097 = vadd.f32 %v2079, %v1313
        %v2098 = vadd.f32 %v2081, %v1314
        %v2099 = vpack.c.bf16 %v2087, %v2083
        %v2100 = vpack.c.bf16 %v2088, %v2084
        %v2101 = vpack.c.bf16 %v2089, %v2085
        %v2102 = vpack.c.bf16 %v2090, %v2086
        %v2103 = vpack.c.bf16 %v2095, %v2091
        %v2104 = vpack.c.bf16 %v2096, %v2092
        %v2105 = vpack.c.bf16 %v2097, %v2093
        %v2106 = vpack.c.bf16 %v2098, %v2094
        %v2107 = vld [vmem:[%s325] sm:$0xf]
        %v2108 = vld [vmem:[%s325 + $0x4] sm:$0xf]
        %v2109 = vld [vmem:[%s325 + $0x8] sm:$0xf]
        %v2110 = vld [vmem:[%s325 + $0xc] sm:$0xf]
        %v2111 = vld [vmem:[%s325 + $0x10] sm:$0xf]
        %v2112 = vld [vmem:[%s325 + $0x14] sm:$0xf]
        %v2113 = vld [vmem:[%s325 + $0x18] sm:$0xf]
        %v2114 = vld [vmem:[%s325 + $0x1c] sm:$0xf]
        %v2115 = vld [vmem:[%s325 + $0x20] sm:$0xf]
        %v2116 = vld [vmem:[%s325 + $0x24] sm:$0xf]
        %v2117 = vld [vmem:[%s325 + $0x28] sm:$0xf]
        %v2118 = vld [vmem:[%s325 + $0x2c] sm:$0xf]
        %v2119 = vld [vmem:[%s325 + $0x30] sm:$0xf]
        %v2120 = vld [vmem:[%s325 + $0x34] sm:$0xf]
        %v2121 = vld [vmem:[%s325 + $0x38] sm:$0xf]
        %v2122 = vld [vmem:[%s325 + $0x3c] sm:$0xf]
        %v2123 = vld [vmem:[%s325 + $0x40] sm:$0xf]
        %v2124 = vld [vmem:[%s325 + $0x44] sm:$0xf]
        %v2125 = vld [vmem:[%s325 + $0x48] sm:$0xf]
        %v2126 = vld [vmem:[%s325 + $0x4c] sm:$0xf]
        %v2127 = vld [vmem:[%s325 + $0x50] sm:$0xf]
        %v2128 = vld [vmem:[%s325 + $0x54] sm:$0xf]
        %v2129 = vld [vmem:[%s325 + $0x58] sm:$0xf]
        %v2130 = vld [vmem:[%s325 + $0x5c] sm:$0xf]
        %v2131 = vld [vmem:[%s325 + $0x60] sm:$0xf]
        %v2132 = vld [vmem:[%s325 + $0x64] sm:$0xf]
        %v2133 = vld [vmem:[%s325 + $0x68] sm:$0xf]
        %v2134 = vld [vmem:[%s325 + $0x6c] sm:$0xf]
        %v2135 = vld [vmem:[%s325 + $0x70] sm:$0xf]
        %v2136 = vld [vmem:[%s325 + $0x74] sm:$0xf]
        %v2137 = vld [vmem:[%s325 + $0x78] sm:$0xf]
        %v2138 = vld [vmem:[%s325 + $0x7c] sm:$0xf]
        %v2139 = vld [vmem:[%s325 + $0x80] sm:$0xf]
        %v2140 = vld [vmem:[%s325 + $0x84] sm:$0xf]
        %v2141 = vld [vmem:[%s325 + $0x88] sm:$0xf]
        %v2142 = vld [vmem:[%s325 + $0x8c] sm:$0xf]
        %v2143 = vld [vmem:[%s325 + $0x90] sm:$0xf]
        %v2144 = vld [vmem:[%s325 + $0x94] sm:$0xf]
        %v2145 = vld [vmem:[%s325 + $0x98] sm:$0xf]
        %v2146 = vld [vmem:[%s325 + $0x9c] sm:$0xf]
        %v2147 = vld [vmem:[%s325 + $0xa0] sm:$0xf]
        %v2148 = vld [vmem:[%s325 + $0xa4] sm:$0xf]
        %v2149 = vld [vmem:[%s325 + $0xa8] sm:$0xf]
        %v2150 = vld [vmem:[%s325 + $0xac] sm:$0xf]
        %v2151 = vld [vmem:[%s325 + $0xb0] sm:$0xf]
        %v2152 = vld [vmem:[%s325 + $0xb4] sm:$0xf]
        %v2153 = vld [vmem:[%s325 + $0xb8] sm:$0xf]
        %v2154 = vld [vmem:[%s325 + $0xbc] sm:$0xf]
        %v2155 = vld [vmem:[%s325 + $0xc0] sm:$0xf]
        %v2156 = vld [vmem:[%s325 + $0xc4] sm:$0xf]
        %v2157 = vld [vmem:[%s325 + $0xc8] sm:$0xf]
        %v2158 = vld [vmem:[%s325 + $0xcc] sm:$0xf]
        %v2159 = vld [vmem:[%s325 + $0xd0] sm:$0xf]
        %v2160 = vld [vmem:[%s325 + $0xd4] sm:$0xf]
        %v2161 = vld [vmem:[%s325 + $0xd8] sm:$0xf]
        %v2162 = vld [vmem:[%s325 + $0xdc] sm:$0xf]
        %v2163 = vld [vmem:[%s325 + $0xe0] sm:$0xf]
        %v2164 = vld [vmem:[%s325 + $0xe4] sm:$0xf]
        %v2165 = vld [vmem:[%s325 + $0xe8] sm:$0xf]
        %v2166 = vld [vmem:[%s325 + $0xec] sm:$0xf]
        %v2167 = vld [vmem:[%s325 + $0xf0] sm:$0xf]
        %v2168 = vld [vmem:[%s325 + $0xf4] sm:$0xf]
        %v2169 = vld [vmem:[%s325 + $0xf8] sm:$0xf]
        %v2170 = vld [vmem:[%s325 + $0xfc] sm:$0xf]
        %v2235 = vunpack.c.l.b16 %v2107
        %v2236 = vunpack.c.l.b16 %v2108
        %v2237 = vunpack.c.l.b16 %v2109
        %v2238 = vunpack.c.l.b16 %v2110
        %v2239 = vunpack.c.l.b16 %v2111
        %v2240 = vunpack.c.l.b16 %v2112
        %v2241 = vunpack.c.l.b16 %v2113
        %v2242 = vunpack.c.l.b16 %v2114
        %v2243 = vunpack.c.l.b16 %v2115
        %v2244 = vunpack.c.l.b16 %v2116
        %v2245 = vunpack.c.l.b16 %v2117
        %v2246 = vunpack.c.l.b16 %v2118
        %v2247 = vunpack.c.l.b16 %v2119
        %v2248 = vunpack.c.l.b16 %v2120
        %v2249 = vunpack.c.l.b16 %v2121
        %v2250 = vunpack.c.l.b16 %v2122
        %v2251 = vunpack.c.l.b16 %v2123
        %v2252 = vunpack.c.l.b16 %v2124
        %v2253 = vunpack.c.l.b16 %v2125
        %v2254 = vunpack.c.l.b16 %v2126
        %v2255 = vunpack.c.l.b16 %v2127
        %v2256 = vunpack.c.l.b16 %v2128
        %v2257 = vunpack.c.l.b16 %v2129
        %v2258 = vunpack.c.l.b16 %v2130
        %v2259 = vunpack.c.l.b16 %v2131
        %v2260 = vunpack.c.l.b16 %v2132
        %v2261 = vunpack.c.l.b16 %v2133
        %v2262 = vunpack.c.l.b16 %v2134
        %v2263 = vunpack.c.l.b16 %v2135
        %v2264 = vunpack.c.l.b16 %v2136
        %v2265 = vunpack.c.l.b16 %v2137
        %v2266 = vunpack.c.l.b16 %v2138
        %v2267 = vunpack.c.l.b16 %v2139
        %v2268 = vunpack.c.l.b16 %v2140
        %v2269 = vunpack.c.l.b16 %v2141
        %v2270 = vunpack.c.l.b16 %v2142
        %v2271 = vunpack.c.l.b16 %v2143
        %v2272 = vunpack.c.l.b16 %v2144
        %v2273 = vunpack.c.l.b16 %v2145
        %v2274 = vunpack.c.l.b16 %v2146
        %v2275 = vunpack.c.l.b16 %v2147
        %v2276 = vunpack.c.l.b16 %v2148
        %v2277 = vunpack.c.l.b16 %v2149
        %v2278 = vunpack.c.l.b16 %v2150
        %v2279 = vunpack.c.l.b16 %v2151
        %v2280 = vunpack.c.l.b16 %v2152
        %v2281 = vunpack.c.l.b16 %v2153
        %v2282 = vunpack.c.l.b16 %v2154
        %v2283 = vunpack.c.l.b16 %v2155
        %v2284 = vunpack.c.l.b16 %v2156
        %v2285 = vunpack.c.l.b16 %v2157
        %v2286 = vunpack.c.l.b16 %v2158
        %v2287 = vunpack.c.l.b16 %v2159
        %v2288 = vunpack.c.l.b16 %v2160
        %v2289 = vunpack.c.l.b16 %v2161
        %v2290 = vunpack.c.l.b16 %v2162
        %v2291 = vunpack.c.l.b16 %v2163
        %v2292 = vunpack.c.l.b16 %v2164
        %v2293 = vunpack.c.l.b16 %v2165
        %v2294 = vunpack.c.l.b16 %v2166
        %v2295 = vunpack.c.l.b16 %v2167
        %v2296 = vunpack.c.l.b16 %v2168
        %v2297 = vunpack.c.l.b16 %v2169
        %v2298 = vunpack.c.l.b16 %v2170
        %v2299 = vpack.c.b16 %v2236, %v2235
        %v2300 = vpack.c.b16 %v2238, %v2237
        %v2301 = vpack.c.b16 %v2240, %v2239
        %v2302 = vpack.c.b16 %v2242, %v2241
        %v2303 = vpack.c.b16 %v2244, %v2243
        %v2304 = vpack.c.b16 %v2246, %v2245
        %v2305 = vpack.c.b16 %v2248, %v2247
        %v2306 = vpack.c.b16 %v2250, %v2249
        %v2307 = vpack.c.b16 %v2252, %v2251
        %v2308 = vpack.c.b16 %v2254, %v2253
        %v2309 = vpack.c.b16 %v2256, %v2255
        %v2310 = vpack.c.b16 %v2258, %v2257
        %v2311 = vpack.c.b16 %v2260, %v2259
        %v2312 = vpack.c.b16 %v2262, %v2261
        %v2313 = vpack.c.b16 %v2264, %v2263
        %v2314 = vpack.c.b16 %v2266, %v2265
        %v2315 = vpack.c.b16 %v2268, %v2267
        %v2316 = vpack.c.b16 %v2270, %v2269
        %v2317 = vpack.c.b16 %v2272, %v2271
        %v2318 = vpack.c.b16 %v2274, %v2273
        %v2319 = vpack.c.b16 %v2276, %v2275
        %v2320 = vpack.c.b16 %v2278, %v2277
        %v2321 = vpack.c.b16 %v2280, %v2279
        %v2322 = vpack.c.b16 %v2282, %v2281
        %v2323 = vpack.c.b16 %v2284, %v2283
        %v2324 = vpack.c.b16 %v2286, %v2285
        %v2325 = vpack.c.b16 %v2288, %v2287
        %v2326 = vpack.c.b16 %v2290, %v2289
        %v2327 = vpack.c.b16 %v2292, %v2291
        %v2328 = vpack.c.b16 %v2294, %v2293
        %v2329 = vpack.c.b16 %v2296, %v2295
        %v2330 = vpack.c.b16 %v2298, %v2297
        %2363 = vmatprep.subr.bf16.mxu0 0
        %2364 = vmatpush1.bf16.msra.mxu0 %v2299
        %2365 = vmatprep.subr.bf16.mxu0 0
        %2366 = vmatpush1.bf16.msra.mxu0 %v2300
        %2367 = vmatprep.subr.bf16.mxu0 0
        %2368 = vmatpush1.bf16.msra.mxu0 %v2301
        %2369 = vmatprep.subr.bf16.mxu0 0
        %2370 = vmatpush1.bf16.msra.mxu0 %v2302
        %2371 = vmatprep.subr.bf16.mxu0 0
        %2372 = vmatpush1.bf16.msra.mxu0 %v2303
        %2373 = vmatprep.subr.bf16.mxu0 0
        %2374 = vmatpush1.bf16.msra.mxu0 %v2304
        %2375 = vmatprep.subr.bf16.mxu0 0
        %2376 = vmatpush1.bf16.msra.mxu0 %v2305
        %2377 = vmatprep.subr.bf16.mxu0 0
        %2378 = vmatpush1.bf16.msra.mxu0 %v2306
        %2379 = vmatprep.subr.bf16.mxu0 0
        %2380 = vmatpush1.bf16.msra.mxu0 %v2307
        %2381 = vmatprep.subr.bf16.mxu0 0
        %2382 = vmatpush1.bf16.msra.mxu0 %v2308
        %2383 = vmatprep.subr.bf16.mxu0 0
        %2384 = vmatpush1.bf16.msra.mxu0 %v2309
        %2385 = vmatprep.subr.bf16.mxu0 0
        %2386 = vmatpush1.bf16.msra.mxu0 %v2310
        %2387 = vmatprep.subr.bf16.mxu0 0
        %2388 = vmatpush1.bf16.msra.mxu0 %v2311
        %2389 = vmatprep.subr.bf16.mxu0 0
        %2390 = vmatpush1.bf16.msra.mxu0 %v2312
        %2391 = vmatprep.subr.bf16.mxu0 0
        %2392 = vmatpush1.bf16.msra.mxu0 %v2313
        %2393 = vmatprep.subr.bf16.mxu0 0
        %2394 = vmatpush1.bf16.msra.mxu0 %v2314
        %2395 = vmatprep.mubr.bf16.mxu0 %v2100
        %2396 = vmatmul.mubr.bf16.gmra.mrb[0].mxu0 %v2099
        %v2397 = vpop.f32.mrb[0].mxu0
        %v2398 = vadd.f32 0.0, %v2397
        %v2399 = vpop.f32.mrb[0].mxu0
        %v2400 = vpop.f32.mrb[0].mxu0
        %v2401 = vadd.f32 0.0, %v2400
        %v2402 = vpop.f32.mrb[0].mxu0
        %2403 = vmatprep.mubr.bf16.mxu0 %v2104
        %2404 = vmatmul.mubr.bf16.gmra.mrb[0].mxu0 %v2103
        %v2405 = vpop.f32.mrb[0].mxu0
        %v2406 = vadd.f32 0.0, %v2405
        %v2407 = vpop.f32.mrb[0].mxu0
        %v2408 = vpop.f32.mrb[0].mxu0
        %v2409 = vadd.f32 0.0, %v2408
        %v2410 = vpop.f32.mrb[0].mxu0
        %2411 = vdwg.mxu0
        %2412 = vmatprep.subr.bf16.mxu0 0
        %2413 = vmatpush1.bf16.msra.mxu0 %v2315
        %2414 = vmatprep.subr.bf16.mxu0 0
        %2415 = vmatpush1.bf16.msra.mxu0 %v2316
        %2416 = vmatprep.subr.bf16.mxu0 0
        %2417 = vmatpush1.bf16.msra.mxu0 %v2317
        %2418 = vmatprep.subr.bf16.mxu0 0
        %2419 = vmatpush1.bf16.msra.mxu0 %v2318
        %2420 = vmatprep.subr.bf16.mxu0 0
        %2421 = vmatpush1.bf16.msra.mxu0 %v2319
        %2422 = vmatprep.subr.bf16.mxu0 0
        %2423 = vmatpush1.bf16.msra.mxu0 %v2320
        %2424 = vmatprep.subr.bf16.mxu0 0
        %2425 = vmatpush1.bf16.msra.mxu0 %v2321
        %2426 = vmatprep.subr.bf16.mxu0 0
        %2427 = vmatpush1.bf16.msra.mxu0 %v2322
        %2428 = vmatprep.subr.bf16.mxu0 0
        %2429 = vmatpush1.bf16.msra.mxu0 %v2323
        %2430 = vmatprep.subr.bf16.mxu0 0
        %2431 = vmatpush1.bf16.msra.mxu0 %v2324
        %2432 = vmatprep.subr.bf16.mxu0 0
        %2433 = vmatpush1.bf16.msra.mxu0 %v2325
        %2434 = vmatprep.subr.bf16.mxu0 0
        %2435 = vmatpush1.bf16.msra.mxu0 %v2326
        %2436 = vmatprep.subr.bf16.mxu0 0
        %2437 = vmatpush1.bf16.msra.mxu0 %v2327
        %2438 = vmatprep.subr.bf16.mxu0 0
        %2439 = vmatpush1.bf16.msra.mxu0 %v2328
        %2440 = vmatprep.subr.bf16.mxu0 0
        %2441 = vmatpush1.bf16.msra.mxu0 %v2329
        %2442 = vmatprep.subr.bf16.mxu0 0
        %2443 = vmatpush1.bf16.msra.mxu0 %v2330
        %2444 = vmatprep.mubr.bf16.mxu0 %v2102
        %2445 = vmatmul.mubr.bf16.gmra.mrb[0].mxu0 %v2101
        %v2446 = vpop.f32.mrb[0].mxu0
        %v2447 = vadd.f32 %v2398, %v2446
        %v2448 = vpop.f32.mrb[0].mxu0
        %v2449 = vpop.f32.mrb[0].mxu0
        %v2450 = vadd.f32 %v2401, %v2449
        %v2451 = vpop.f32.mrb[0].mxu0
        %2452 = vmatprep.mubr.bf16.mxu0 %v2106
        %2453 = vmatmul.mubr.bf16.gmra.mrb[0].mxu0 %v2105
        %v2454 = vpop.f32.mrb[0].mxu0
        %v2455 = vadd.f32 %v2406, %v2454
        %v2456 = vpop.f32.mrb[0].mxu0
        %v2457 = vpop.f32.mrb[0].mxu0
        %v2458 = vadd.f32 %v2409, %v2457
        %v2459 = vpop.f32.mrb[0].mxu0
        %2460 = vdwg.mxu0
        %v2461 = vld [vmem:[#allocation2] sm:$0xf]
        %v2462 = vadd.f32 %v2461, %v2447
        %v2464 = vrot.slane %v2447, 4
        %2465 = vrot.lane.b32.xlu0 %v2464, 112
        %v2466 = vpop.permute.xlu0 %2465
        %v2468 = vadd.f32 %v2462, %v2466
        %2470 = vrot.lane.b32.xlu0 %v2450, 96
        %v2471 = vpop.permute.xlu0 %2470
        %v2473 = vadd.f32 %v2468, %v2471
        %v2474 = vrot.slane %v2450, 4
        %2475 = vrot.lane.b32.xlu0 %v2474, 80
        %v2476 = vpop.permute.xlu0 %2475
        %v2478 = vadd.f32 %v2473, %v2476
        %2480 = vrot.lane.b32.xlu0 %v2455, 64
        %v2481 = vpop.permute.xlu0 %2480
        %v2483 = vadd.f32 %v2478, %v2481
        %v2484 = vrot.slane %v2455, 4
        %2485 = vrot.lane.b32.xlu0 %v2484, 48
        %v2486 = vpop.permute.xlu0 %2485
        %v2488 = vadd.f32 %v2483, %v2486
        %2490 = vrot.lane.b32.xlu0 %v2458, 32
        %v2491 = vpop.permute.xlu0 %2490
        %v2493 = vadd.f32 %v2488, %v2491
        %v2494 = vrot.slane %v2458, 4
        %2495 = vrot.lane.b32.xlu0 %v2494, 16
        %v2496 = vpop.permute.xlu0 %2495
        %v2498 = vadd.f32 %v2493, %v2496
        %vm2499 = vcmask 125952
        %2500 = vst.msk [vmem:[#allocation2] sm:$0xf] %vm2499, %v2498
        // Predicated region
        $region53: #{dc_module_forward.1} parent=47 // pred_check
          %p2501 = pneg %p328
        $region54: #{dc_module_forward.1} parent=47 // pred_check_branch
          %2503 = sbr.rel (%p2501) target = $region56
        $region55: #{dc_module_forward.1} parent=47 // pred_region
          %v2504 = vld [vmem:[#allocation2] sm:$0xf]
          %v2505 = vld [vmem:[%s6] sm:$0x1]
          %v2507 = vlaneseq
          %v2508 = vshrl.u32 %v2507, 7
          %v2509 = vsub.s32 0, %v2508
          %v2510 = vrot.slane %v2505, %v2509
          %v2512 = vadd.f32 %v2504, %v2510
          %2513 = vst.msk [vmem:[%s310] sm:$0xf] %vm2499, %v2512
        $region56: #{dc_module_forward.1} parent=47 // pred_fallthru
          _
        %s2514 = sand.u32 %s200, 1
        %s2515 = scalar_lea.sflag [#allocation4], %s2514
        %s2516 = sand.u32 %s200, 1
        %s2517 = smul.addr %s2516, 4
        %s2518 = scalar_lea.vmem [#allocation3], %s2517
        // Predicated region
        $region57: #{dc_module_forward.1} parent=47 // pred_check
          %p2519 = pneg %p210
        $region58: #{dc_module_forward.1} parent=47 // pred_check_branch
          %2521 = sbr.rel (%p2519) target = $region60
        $region59: #{dc_module_forward.1} parent=47 // pred_region
          %s2523 = ssub.s32 64, 64
          %2524 = vsyncadd %s2515, %s2523
          %s2525 = smul.addr %s25, 64
          %s2526 = scalar_lea.hbm %s7, %s2525
          %s2528 = sshll.u32 %s2518, 4
          %s2529 = int_to_ptr.vmem [resolvable:$true] %s2528
          %2531 = dma.vmem_to_hbm [thread:$0]  %s2529, 64, %s2526, %s2515
        $region60: #{dc_module_forward.1} parent=47 // pred_fallthru
          _
      $region48: #{dc_module_forward.1} parent=5 // pred_fallthru
        _
      %p2532 = scmp.le.s32.totalorder 2, %s16
      // Predicated region
      $region61: #{dc_module_forward.1} parent=5 // pred_check
        %p2533 = pneg %p2532
      $region62: #{dc_module_forward.1} parent=5 // pred_check_branch
        %2535 = sbr.rel (%p2533) target = $region64
      $region63: #{dc_module_forward.1} parent=5 // pred_region
        %s2536 = ssub.s32 %s16, 2
        // Predicated region
        $region65: #{dc_module_forward.1} parent=63 // pred_check
          %p2537 = pneg %p216
        $region66: #{dc_module_forward.1} parent=63 // pred_check_branch
          %2539 = sbr.rel (%p2537) target = $region68
        $region67: #{dc_module_forward.1} parent=63 // pred_region
          %s2540 = sand.u32 %s201, 1
          %s2541 = scalar_lea.sflag [#allocation4], %s2540
          %s2542 = sand.u32 %s201, 1
          %s2543 = smul.addr %s2542, 4
          %s2544 = scalar_lea.vmem [#allocation3], %s2543
          %2545 = dma.done %s2541, 64
        $region68: #{dc_module_forward.1} parent=63 // pred_fallthru
          _
      $region64: #{dc_module_forward.1} parent=5 // pred_fallthru
        _
    $region6: #{dc_module_forward.1} parent=1 // loop_footer
      %s20 = sadd.s32 1, %s16
    $region7: #{dc_module_forward.1} parent=1 // loop_footer_branch
      %15 = sbr.rel target = $region3
    $region8: #{dc_module_forward.1} parent=1 // loop_exit
      _
    %2546 = vsyncpa [#allocation4], 1
    %s2547 = scalar_lea.sflag [#allocation4], 1
    %2548 = vsyncpa %s2547, 1

</llo_original>
